<compile_context>
chip_gen: v6e
topology: v6e:2x2x1
jax: 0.10.0
libtpu: 0.0.40
codegen_flags: <defaults>
</compile_context>

<pallas_src>
import functools

import jax
import jax.numpy as jnp
from jax import lax
from jax.experimental import pallas as pl
from jax.experimental.pallas import tpu as pltpu

K = 4          # ConvTranspose2d kernel size
STRIDE = 2
PAD = 1


def _upsample_kernel(body_ref, halo_ref, w_ref, shift_ref, o_ref, xw_ref,
                     *, TH, W, Cin, Cout2):
    """One (batch, row-tile) per grid step.

    body_ref  : (1, TH, W+2, Cin)    bf16  padded-input rows [t*TH, (t+1)*TH)
    halo_ref  : (1, 2,  W+2, Cin)    bf16  padded-input rows [(t+1)*TH, (t+1)*TH+2)
    w_ref     : (2, 2, 3*Cin, Cout2) bf16  polyphase weights (BN scale folded in),
                                            indexed [ph, a, b*Cin+ci, pw*Cout+co]
    shift_ref : (1, Cout2)           f32   BN shift (conv bias/mean/beta folded)
    o_ref     : (1, TH, 2, W, Cout2) bf16  output; axis 2 = row phase,
                                            last axis = (col phase, channel)
    xw_ref    : ((TH+2)*W, 3*Cin)    bf16  scratch: width-im2col of the row window
    """
    # ---- width-im2col (once per step): xw[(r, n) flat, b*Cin+ci] = win[r, n+b, ci]
    for b in range(3):
        xw_ref[0:TH * W, b * Cin:(b + 1) * Cin] = (
            body_ref[0, :, b:b + W, :].reshape(TH * W, Cin))
        xw_ref[TH * W:(TH + 2) * W, b * Cin:(b + 1) * Cin] = (
            halo_ref[0, :, b:b + W, :].reshape(2 * W, Cin))

    shift = shift_ref[0]                                        # (Cout2,) f32

    # ---- two row phases; each = two aligned loads + two MXU dots (f32 acc) ----
    for ph in range(2):
        p0 = xw_ref[ph * W:(ph + TH) * W, :]                    # (TH*W, 3*Cin)
        p1 = xw_ref[(ph + 1) * W:(ph + 1 + TH) * W, :]
        acc = jnp.dot(p0, w_ref[ph, 0], preferred_element_type=jnp.float32)
        acc = acc + jnp.dot(p1, w_ref[ph, 1],
                            preferred_element_type=jnp.float32)  # (TH*W, Cout2)
        y = jnp.maximum(acc + shift, 0.0).astype(o_ref.dtype)
        o_ref[0, :, ph, :, :] = y.reshape(TH, W, Cout2)


def _vmem_plan():
    """Per-generation (row-tile VMEM budget, vmem_limit_bytes)."""
    try:
        kind = jax.devices()[0].device_kind.lower()
    except Exception:
        kind = ""
    if "v5" in kind or "v6" in kind:          # 128 MiB VMEM chips
        return 20 * 1024 * 1024, 96 * 1024 * 1024
    # v7x (64 MiB per TensorCore) and anything unknown: stay conservative.
    return 12 * 1024 * 1024, 48 * 1024 * 1024


def _plan_rows(H, W, Cin, Cout, budget):
    """Pick an even row-tile TH and (possibly padded) row count Hp."""
    # Per-input-row VMEM bytes: double-buffered body + double-buffered bf16 out
    # tile + im2col scratch + live matmul operands/accumulator.
    per_row = (4 * (W + 2) + 18 * W) * Cin + 28 * W * Cout
    const = 48 * Cin * Cout + 8 * (W + 2) * Cin + 16 * Cout
    cap = max(2, (budget - const) // max(per_row, 1))
    cap -= cap % 2
    cap = max(cap, 2)
    if H <= cap:
        th = max(H + (H % 2), 2)              # round odd H up to even
        return th, th
    best = 0
    d = cap
    while d >= 2:                             # largest even divisor of H <= cap
        if d % 2 == 0 and H % d == 0:
            best = d
            break
        d -= 1
    if best >= max(2, cap // 2):
        return best, H
    # Pathological H (e.g. prime): pad rows instead of collapsing to TH=1.
    th = cap
    hp = ((H + th - 1) // th) * th
    return th, hp


def upsample_block_forward(x_nchw, weight, bias, gamma, beta, running_mean,
                           running_var, eps=1e-5):
    """Eval-mode forward of UpsampleBlock.

    x_nchw : (N, Cin, H, W)    float32
    weight : (Cin, Cout, 4, 4) PyTorch ConvTranspose2d weight layout
    bias, gamma, beta, running_mean, running_var : (Cout,)
    returns: (N, Cout, 2H, 2W) float32
    """
    N, Cin, H, W = x_nchw.shape
    Cout = weight.shape[1]
    Cout2 = 2 * Cout
    budget, vmem_limit = _vmem_plan()
    TH, Hp = _plan_rows(H, W, Cin, Cout, budget)
    nt = Hp // TH
    th_half = TH // 2

    # bf16 BEFORE the relayout; NCHW -> NHWC; pad 1 (polyphase) + bottom pad to Hp.
    x = jnp.transpose(x_nchw.astype(jnp.bfloat16), (0, 2, 3, 1))     # (N,H,W,Cin)
    xpad = jnp.pad(x, ((0, 0), (1, 1 + Hp - H), (1, 1), (0, 0)))     # (N,Hp+2,W+2,Cin)

    # Eval-mode BN folded: scale into the weights (in f32), shift into the epilogue.
    scale = (gamma / jnp.sqrt(running_var + eps)).astype(jnp.float32)        # (Cout,)
    shift = ((bias - running_mean) * scale + beta).astype(jnp.float32)       # (Cout,)
    w_sc = weight.astype(jnp.float32) * scale[None, :, None, None]           # (Cin,Cout,4,4)

    # Polyphase weights WT[ph, a, b'*Cin+ci, pw*Cout+co]:
    #   out[2m+ph, 2n+pw, co] =
    #     sum_{a,b,ci} xpad[m+ph+a, n+pw+b, ci] * w[ci, co, 3-ph-2a, 3-pw-2b]
    # re-indexed with b' = pw + b so both column phases share one K axis of 3*Cin
    # (the unused third of K is zero for each column phase).
    wt = jnp.zeros((2, 2, 3, Cin, 2, Cout), jnp.float32)
    for ph in range(2):
        for a in range(2):
            kh = 3 - ph - 2 * a
            for pw in range(2):
                for b in range(2):
                    bp = pw + b
                    kw = 3 - pw - 2 * b
                    wt = wt.at[ph, a, bp, :, pw, :].set(w_sc[:, :, kh, kw])
    wt = wt.reshape(2, 2, 3 * Cin, Cout2).astype(jnp.bfloat16)
    shift2 = jnp.tile(shift, 2).reshape(1, Cout2)

    kernel = functools.partial(_upsample_kernel, TH=TH, W=W, Cin=Cin, Cout2=Cout2)

    out5 = pl.pallas_call(
        kernel,
        out_shape=jax.ShapeDtypeStruct((N, Hp, 2, W, Cout2), jnp.bfloat16),
        grid_spec=pltpu.PrefetchScalarGridSpec(
            num_scalar_prefetch=0,
            grid=(N, nt),
            in_specs=[
                # body: non-overlapping TH-row blocks of the padded input
                pl.BlockSpec((1, TH, W + 2, Cin), lambda n, t: (n, t, 0, 0)),
                # halo: the 2 rows just below the body block (tiny re-read)
                pl.BlockSpec((1, 2, W + 2, Cin),
                             lambda n, t: (n, (t + 1) * th_half, 0, 0)),
                # resident polyphase weights and BN shift
                pl.BlockSpec((2, 2, 3 * Cin, Cout2), lambda n, t: (0, 0, 0, 0)),
                pl.BlockSpec((1, Cout2), lambda n, t: (0, 0)),
            ],
            out_specs=pl.BlockSpec((1, TH, 2, W, Cout2),
                                   lambda n, t: (n, t, 0, 0, 0)),
            scratch_shapes=[pltpu.VMEM(((TH + 2) * W, 3 * Cin), jnp.bfloat16)],
        ),
        compiler_params=pltpu.CompilerParams(
            dimension_semantics=("parallel", "parallel"),
            vmem_limit_bytes=vmem_limit),
    )(xpad, xpad, wt, shift2)

    # De-interleave is free: (N, H, 2, W, 2*Cout) row-major == (N, 2H, 2W, Cout) NHWC.
    out = out5[:, :H].reshape(N, 2 * H, 2 * W, Cout)
    # Single standard NHWC -> NCHW transpose; f32 upcast fuses into it.
    return jnp.transpose(out, (0, 3, 1, 2)).astype(x_nchw.dtype)


def _reference_forward(x_nchw, weight, bias, gamma, beta, running_mean,
                       running_var, eps=1e-5):
    """Pure-JAX reference (lhs-dilated conv == ConvTranspose2d), eval BN + ReLU,
    with the matmul inputs rounded to bf16 to match the kernel's MXU precision."""
    xb = x_nchw.astype(jnp.bfloat16).astype(jnp.float32)
    wb = weight.astype(jnp.bfloat16).astype(jnp.float32)
    x = jnp.transpose(xb, (0, 2, 3, 1))                             # NHWC
    w_flip = jnp.transpose(wb[:, :, ::-1, ::-1], (2, 3, 0, 1))      # HWIO
    y = lax.conv_general_dilated(
        x, w_flip, window_strides=(1, 1),
        padding=((K - 1 - PAD, K - 1 - PAD), (K - 1 - PAD, K - 1 - PAD)),
        lhs_dilation=(STRIDE, STRIDE),
        dimension_numbers=("NHWC", "HWIO", "NHWC"))
    y = y + bias
    y = (y - running_mean) / jnp.sqrt(running_var + eps) * gamma + beta
    y = jnp.maximum(y, 0.0)
    return jnp.transpose(y, (0, 3, 1, 2))


if __name__ == "__main__":
    key = jax.random.PRNGKey(0)
    k_x, k_w, k_b, k_g, k_be, k_m, k_v = jax.random.split(key, 7)

    N, Cin, Cout, H, W = 2, 4, 8, 16, 16

    x = jax.random.normal(k_x, (N, Cin, H, W), dtype=jnp.float32)
    weight = 0.1 * jax.random.normal(k_w, (Cin, Cout, K, K), dtype=jnp.float32)
    bias = 0.05 * jax.random.normal(k_b, (Cout,), dtype=jnp.float32)
    gamma = 1.0 + 0.1 * jax.random.normal(k_g, (Cout,), dtype=jnp.float32)
    beta = 0.05 * jax.random.normal(k_be, (Cout,), dtype=jnp.float32)
    running_mean = 0.1 * jax.random.normal(k_m, (Cout,), dtype=jnp.float32)
    running_var = jnp.abs(
        1.0 + 0.1 * jax.random.normal(k_v, (Cout,), dtype=jnp.float32))

    fwd = jax.jit(upsample_block_forward)
    out = jax.block_until_ready(
        fwd(x, weight, bias, gamma, beta, running_mean, running_var))

    ref = _reference_forward(x, weight, bias, gamma, beta,
                             running_mean, running_var)
    assert out.shape == (N, Cout, STRIDE * H, STRIDE * W), out.shape
    max_err = float(jnp.max(jnp.abs(out - ref)))
    # Tolerance covers the bf16 output store and the bf16 cast of the
    # scale-folded weights (the reference keeps BN in f32).
    assert jnp.allclose(out, ref, atol=2e-2, rtol=2e-2), max_err

    print("KERNEL_OK")
</pallas_src>

<mosaic_0001>
module attributes {stable_mosaic.version = 11 : i64} {
  func.func @_upsample_kernel(%arg0: i32, %arg1: i32, %arg2: memref<1x16x18x4xbf16, #tpu.memory_space<vmem>>, %arg3: memref<1x2x18x4xbf16, #tpu.memory_space<vmem>>, %arg4: memref<2x2x12x16xbf16, #tpu.memory_space<vmem>>, %arg5: memref<1x16xf32, #tpu.memory_space<vmem>>, %arg6: memref<1x16x2x16x16xbf16, #tpu.memory_space<vmem>>, %arg7: memref<288x12xbf16, #tpu.memory_space<vmem>>) attributes {dimension_semantics = [#tpu.dimension_semantics<parallel>, #tpu.dimension_semantics<parallel>], iteration_bounds = array<i64: 2, 1>, scalar_prefetch = 0 : i64, scratch_operands = 1 : i64, tpu.core_type = #tpu.core_type<tc>, window_params = [{transform_indices = @transform_0, window_bounds = array<i64: 1, 16, 18, 4>}, {transform_indices = @transform_1, window_bounds = array<i64: 1, 2, 18, 4>}, {pipeline_mode = #tpu.pipeline_mode<synchronous>, transform_indices = @transform_2, window_bounds = array<i64: 2, 2, 12, 16>}, {pipeline_mode = #tpu.pipeline_mode<synchronous>, transform_indices = @transform_3, window_bounds = array<i64: 1, 16>}, {transform_indices = @transform_4, window_bounds = array<i64: 1, 16, 2, 16, 16>}]} {
    %c0 = arith.constant 0 : index
    %c0_0 = arith.constant 0 : index
    %c0_1 = arith.constant 0 : index
    %c0_2 = arith.constant 0 : index
    %0 = vector.load %arg2[%c0, %c0_0, %c0_1, %c0_2] : memref<1x16x18x4xbf16, #tpu.memory_space<vmem>>, vector<1x16x16x4xbf16>
    %1 = vector.shape_cast %0 : vector<1x16x16x4xbf16> to vector<16x16x4xbf16>
    %2 = vector.shape_cast %1 : vector<16x16x4xbf16> to vector<256x4xbf16>
    %c0_3 = arith.constant 0 : index
    %c0_4 = arith.constant 0 : index
    %3 = vector.load %arg7[%c0_3, %c0_4] : memref<288x12xbf16, #tpu.memory_space<vmem>>, vector<256x4xbf16>
    tpu.vector_store %arg7[%c0_3, %c0_4], %2 {strides = array<i32>} : memref<288x12xbf16, #tpu.memory_space<vmem>>, vector<256x4xbf16>,
    %c0_5 = arith.constant 0 : index
    %c0_6 = arith.constant 0 : index
    %c0_7 = arith.constant 0 : index
    %c0_8 = arith.constant 0 : index
    %4 = vector.load %arg3[%c0_5, %c0_6, %c0_7, %c0_8] : memref<1x2x18x4xbf16, #tpu.memory_space<vmem>>, vector<1x2x16x4xbf16>
    %5 = vector.shape_cast %4 : vector<1x2x16x4xbf16> to vector<2x16x4xbf16>
    %6 = vector.shape_cast %5 : vector<2x16x4xbf16> to vector<32x4xbf16>
    %c256 = arith.constant 256 : index
    %c0_9 = arith.constant 0 : index
    %7 = vector.load %arg7[%c256, %c0_9] : memref<288x12xbf16, #tpu.memory_space<vmem>>, vector<32x4xbf16>
    tpu.vector_store %arg7[%c256, %c0_9], %6 {strides = array<i32>} : memref<288x12xbf16, #tpu.memory_space<vmem>>, vector<32x4xbf16>,
    %c0_10 = arith.constant 0 : index
    %c0_11 = arith.constant 0 : index
    %c1 = arith.constant 1 : index
    %c0_12 = arith.constant 0 : index
    %8 = vector.load %arg2[%c0_10, %c0_11, %c1, %c0_12] : memref<1x16x18x4xbf16, #tpu.memory_space<vmem>>, vector<1x16x16x4xbf16>
    %9 = vector.shape_cast %8 : vector<1x16x16x4xbf16> to vector<16x16x4xbf16>
    %10 = vector.shape_cast %9 : vector<16x16x4xbf16> to vector<256x4xbf16>
    %c0_13 = arith.constant 0 : index
    %c4 = arith.constant 4 : index
    %11 = vector.load %arg7[%c0_13, %c4] : memref<288x12xbf16, #tpu.memory_space<vmem>>, vector<256x4xbf16>
    tpu.vector_store %arg7[%c0_13, %c4], %10 {strides = array<i32>} : memref<288x12xbf16, #tpu.memory_space<vmem>>, vector<256x4xbf16>,
    %c0_14 = arith.constant 0 : index
    %c0_15 = arith.constant 0 : index
    %c1_16 = arith.constant 1 : index
    %c0_17 = arith.constant 0 : index
    %12 = vector.load %arg3[%c0_14, %c0_15, %c1_16, %c0_17] : memref<1x2x18x4xbf16, #tpu.memory_space<vmem>>, vector<1x2x16x4xbf16>
    %13 = vector.shape_cast %12 : vector<1x2x16x4xbf16> to vector<2x16x4xbf16>
    %14 = vector.shape_cast %13 : vector<2x16x4xbf16> to vector<32x4xbf16>
    %c256_18 = arith.constant 256 : index
    %c4_19 = arith.constant 4 : index
    %15 = vector.load %arg7[%c256_18, %c4_19] : memref<288x12xbf16, #tpu.memory_space<vmem>>, vector<32x4xbf16>
    tpu.vector_store %arg7[%c256_18, %c4_19], %14 {strides = array<i32>} : memref<288x12xbf16, #tpu.memory_space<vmem>>, vector<32x4xbf16>,
    %c0_20 = arith.constant 0 : index
    %c0_21 = arith.constant 0 : index
    %c2 = arith.constant 2 : index
    %c0_22 = arith.constant 0 : index
    %16 = vector.load %arg2[%c0_20, %c0_21, %c2, %c0_22] : memref<1x16x18x4xbf16, #tpu.memory_space<vmem>>, vector<1x16x16x4xbf16>
    %17 = vector.shape_cast %16 : vector<1x16x16x4xbf16> to vector<16x16x4xbf16>
    %18 = vector.shape_cast %17 : vector<16x16x4xbf16> to vector<256x4xbf16>
    %c0_23 = arith.constant 0 : index
    %c8 = arith.constant 8 : index
    %19 = vector.load %arg7[%c0_23, %c8] : memref<288x12xbf16, #tpu.memory_space<vmem>>, vector<256x4xbf16>
    tpu.vector_store %arg7[%c0_23, %c8], %18 {strides = array<i32>} : memref<288x12xbf16, #tpu.memory_space<vmem>>, vector<256x4xbf16>,
    %c0_24 = arith.constant 0 : index
    %c0_25 = arith.constant 0 : index
    %c2_26 = arith.constant 2 : index
    %c0_27 = arith.constant 0 : index
    %20 = vector.load %arg3[%c0_24, %c0_25, %c2_26, %c0_27] : memref<1x2x18x4xbf16, #tpu.memory_space<vmem>>, vector<1x2x16x4xbf16>
    %21 = vector.shape_cast %20 : vector<1x2x16x4xbf16> to vector<2x16x4xbf16>
    %22 = vector.shape_cast %21 : vector<2x16x4xbf16> to vector<32x4xbf16>
    %c256_28 = arith.constant 256 : index
    %c8_29 = arith.constant 8 : index
    %23 = vector.load %arg7[%c256_28, %c8_29] : memref<288x12xbf16, #tpu.memory_space<vmem>>, vector<32x4xbf16>
    tpu.vector_store %arg7[%c256_28, %c8_29], %22 {strides = array<i32>} : memref<288x12xbf16, #tpu.memory_space<vmem>>, vector<32x4xbf16>,
    %c0_30 = arith.constant 0 : index
    %c0_31 = arith.constant 0 : index
    %24 = vector.load %arg5[%c0_30, %c0_31] : memref<1x16xf32, #tpu.memory_space<vmem>>, vector<1x16xf32>
    %25 = vector.shape_cast %24 : vector<1x16xf32> to vector<16xf32>
    %c0_32 = arith.constant 0 : index
    %c0_33 = arith.constant 0 : index
    %26 = vector.load %arg7[%c0_32, %c0_33] : memref<288x12xbf16, #tpu.memory_space<vmem>>, vector<256x12xbf16>
    %c16 = arith.constant 16 : index
    %c0_34 = arith.constant 0 : index
    %27 = vector.load %arg7[%c16, %c0_34] : memref<288x12xbf16, #tpu.memory_space<vmem>>, vector<256x12xbf16>
    %c0_35 = arith.constant 0 : index
    %c0_36 = arith.constant 0 : index
    %c0_37 = arith.constant 0 : index
    %c0_38 = arith.constant 0 : index
    %28 = vector.load %arg4[%c0_35, %c0_36, %c0_37, %c0_38] : memref<2x2x12x16xbf16, #tpu.memory_space<vmem>>, vector<1x1x12x16xbf16>
    %29 = vector.shape_cast %28 : vector<1x1x12x16xbf16> to vector<12x16xbf16>
    %cst = arith.constant dense<0.000000e+00> : vector<256x16xf32>
    %30 = tpu.matmul %26, %29, %cst {dimension_numbers = #tpu.dot_dimension_numbers<[1], [0], [0], [1], [0, 0, 1, 1], [], []>} : vector<256x12xbf16>, vector<12x16xbf16>, vector<256x16xf32> -> vector<256x16xf32>
    %c0_39 = arith.constant 0 : index
    %c1_40 = arith.constant 1 : index
    %c0_41 = arith.constant 0 : index
    %c0_42 = arith.constant 0 : index
    %31 = vector.load %arg4[%c0_39, %c1_40, %c0_41, %c0_42] : memref<2x2x12x16xbf16, #tpu.memory_space<vmem>>, vector<1x1x12x16xbf16>
    %32 = vector.shape_cast %31 : vector<1x1x12x16xbf16> to vector<12x16xbf16>
    %cst_43 = arith.constant dense<0.000000e+00> : vector<256x16xf32>
    %33 = tpu.matmul %27, %32, %cst_43 {dimension_numbers = #tpu.dot_dimension_numbers<[1], [0], [0], [1], [0, 0, 1, 1], [], []>} : vector<256x12xbf16>, vector<12x16xbf16>, vector<256x16xf32> -> vector<256x16xf32>
    %34 = arith.addf %30, %33 : vector<256x16xf32>
    %35 = vector.shape_cast %25 : vector<16xf32> to vector<1x16xf32>
    %36 = vector.broadcast %35 : vector<1x16xf32> to vector<256x16xf32>
    %37 = arith.addf %34, %36 : vector<256x16xf32>
    %cst_44 = arith.constant 0.000000e+00 : f32
    %38 = vector.broadcast %cst_44 : f32 to vector<256x16xf32>
    %39 = arith.maximumf %37, %38 : vector<256x16xf32>
    %40 = arith.truncf %39 : vector<256x16xf32> to vector<256x16xbf16>
    %41 = vector.shape_cast %40 : vector<256x16xbf16> to vector<16x16x16xbf16>
    %c0_45 = arith.constant 0 : index
    %c0_46 = arith.constant 0 : index
    %c0_47 = arith.constant 0 : index
    %c0_48 = arith.constant 0 : index
    %c0_49 = arith.constant 0 : index
    %42 = vector.load %arg6[%c0_45, %c0_46, %c0_47, %c0_48, %c0_49] : memref<1x16x2x16x16xbf16, #tpu.memory_space<vmem>>, vector<1x16x1x16x16xbf16>
    %43 = vector.shape_cast %42 : vector<1x16x1x16x16xbf16> to vector<16x16x16xbf16>
    %44 = vector.shape_cast %41 : vector<16x16x16xbf16> to vector<1x16x1x16x16xbf16>
    tpu.vector_store %arg6[%c0_45, %c0_46, %c0_47, %c0_48, %c0_49], %44 {strides = array<i32>} : memref<1x16x2x16x16xbf16, #tpu.memory_space<vmem>>, vector<1x16x1x16x16xbf16>,
    %c16_50 = arith.constant 16 : index
    %c0_51 = arith.constant 0 : index
    %45 = vector.load %arg7[%c16_50, %c0_51] : memref<288x12xbf16, #tpu.memory_space<vmem>>, vector<256x12xbf16>
    %c32 = arith.constant 32 : index
    %c0_52 = arith.constant 0 : index
    %46 = vector.load %arg7[%c32, %c0_52] : memref<288x12xbf16, #tpu.memory_space<vmem>>, vector<256x12xbf16>
    %c1_53 = arith.constant 1 : index
    %c0_54 = arith.constant 0 : index
    %c0_55 = arith.constant 0 : index
    %c0_56 = arith.constant 0 : index
    %47 = vector.load %arg4[%c1_53, %c0_54, %c0_55, %c0_56] : memref<2x2x12x16xbf16, #tpu.memory_space<vmem>>, vector<1x1x12x16xbf16>
    %48 = vector.shape_cast %47 : vector<1x1x12x16xbf16> to vector<12x16xbf16>
    %cst_57 = arith.constant dense<0.000000e+00> : vector<256x16xf32>
    %49 = tpu.matmul %45, %48, %cst_57 {dimension_numbers = #tpu.dot_dimension_numbers<[1], [0], [0], [1], [0, 0, 1, 1], [], []>} : vector<256x12xbf16>, vector<12x16xbf16>, vector<256x16xf32> -> vector<256x16xf32>
    %c1_58 = arith.constant 1 : index
    %c1_59 = arith.constant 1 : index
    %c0_60 = arith.constant 0 : index
    %c0_61 = arith.constant 0 : index
    %50 = vector.load %arg4[%c1_58, %c1_59, %c0_60, %c0_61] : memref<2x2x12x16xbf16, #tpu.memory_space<vmem>>, vector<1x1x12x16xbf16>
    %51 = vector.shape_cast %50 : vector<1x1x12x16xbf16> to vector<12x16xbf16>
    %cst_62 = arith.constant dense<0.000000e+00> : vector<256x16xf32>
    %52 = tpu.matmul %46, %51, %cst_62 {dimension_numbers = #tpu.dot_dimension_numbers<[1], [0], [0], [1], [0, 0, 1, 1], [], []>} : vector<256x12xbf16>, vector<12x16xbf16>, vector<256x16xf32> -> vector<256x16xf32>
    %53 = arith.addf %49, %52 : vector<256x16xf32>
    %54 = vector.shape_cast %25 : vector<16xf32> to vector<1x16xf32>
    %55 = vector.broadcast %54 : vector<1x16xf32> to vector<256x16xf32>
    %56 = arith.addf %53, %55 : vector<256x16xf32>
    %cst_63 = arith.constant 0.000000e+00 : f32
    %57 = vector.broadcast %cst_63 : f32 to vector<256x16xf32>
    %58 = arith.maximumf %56, %57 : vector<256x16xf32>
    %59 = arith.truncf %58 : vector<256x16xf32> to vector<256x16xbf16>
    %60 = vector.shape_cast %59 : vector<256x16xbf16> to vector<16x16x16xbf16>
    %c0_64 = arith.constant 0 : index
    %c0_65 = arith.constant 0 : index
    %c1_66 = arith.constant 1 : index
    %c0_67 = arith.constant 0 : index
    %c0_68 = arith.constant 0 : index
    %61 = vector.load %arg6[%c0_64, %c0_65, %c1_66, %c0_67, %c0_68] : memref<1x16x2x16x16xbf16, #tpu.memory_space<vmem>>, vector<1x16x1x16x16xbf16>
    %62 = vector.shape_cast %61 : vector<1x16x1x16x16xbf16> to vector<16x16x16xbf16>
    %63 = vector.shape_cast %60 : vector<16x16x16xbf16> to vector<1x16x1x16x16xbf16>
    tpu.vector_store %arg6[%c0_64, %c0_65, %c1_66, %c0_67, %c0_68], %63 {strides = array<i32>} : memref<1x16x2x16x16xbf16, #tpu.memory_space<vmem>>, vector<1x16x1x16x16xbf16>,
    return
  }
  func.func @transform_0(%arg0: i32, %arg1: i32) -> (i32, i32, i32, i32) {
    %c0_i32 = arith.constant 0 : i32
    %c0_i32_0 = arith.constant 0 : i32
    %c0_i32_1 = arith.constant 0 : i32
    return %arg0, %arg1, %c0_i32, %c0_i32_0 : i32, i32, i32, i32
  }
  func.func @transform_1(%arg0: i32, %arg1: i32) -> (i32, i32, i32, i32) {
    %c1_i32 = arith.constant 1 : i32
    %0 = arith.addi %arg1, %c1_i32 : i32
    %c8_i32 = arith.constant 8 : i32
    %1 = arith.muli %0, %c8_i32 : i32
    %c0_i32 = arith.constant 0 : i32
    %c0_i32_0 = arith.constant 0 : i32
    %c0_i32_1 = arith.constant 0 : i32
    return %arg0, %1, %c0_i32, %c0_i32_0 : i32, i32, i32, i32
  }
  func.func @transform_2(%arg0: i32, %arg1: i32) -> (i32, i32, i32, i32) {
    %c0_i32 = arith.constant 0 : i32
    %c0_i32_0 = arith.constant 0 : i32
    %c0_i32_1 = arith.constant 0 : i32
    %c0_i32_2 = arith.constant 0 : i32
    %c0_i32_3 = arith.constant 0 : i32
    return %c0_i32, %c0_i32_0, %c0_i32_1, %c0_i32_2 : i32, i32, i32, i32
  }
  func.func @transform_3(%arg0: i32, %arg1: i32) -> (i32, i32) {
    %c0_i32 = arith.constant 0 : i32
    %c0_i32_0 = arith.constant 0 : i32
    %c0_i32_1 = arith.constant 0 : i32
    return %c0_i32, %c0_i32_0 : i32, i32
  }
  func.func @transform_4(%arg0: i32, %arg1: i32) -> (i32, i32, i32, i32, i32) {
    %c0_i32 = arith.constant 0 : i32
    %c0_i32_0 = arith.constant 0 : i32
    %c0_i32_1 = arith.constant 0 : i32
    %c0_i32_2 = arith.constant 0 : i32
    return %arg0, %arg1, %c0_i32, %c0_i32_0, %c0_i32_1 : i32, i32, i32, i32, i32
  }
}

</mosaic_0001>

<llo_original>
// kernel: tile.8
$region0: #{tile.8}
  #allocation0 [shape = 's32[1]{0}', space=sflag, size = 0x4, scoped, tag = 'scoped memory for tile.8']
  %s0 = inlined_call_operand.vmem [shape: f32[8], index: 0, kind: input, shape index: {}]
  %s1 = inlined_call_operand.vmem [shape: f32[2,8], index: 1, kind: output, shape index: {}]
  // Predicated region
  $region2: #{tile.8} parent=0 // pred_check
    _
  $region3: #{tile.8} parent=0 // pred_check_branch
    %3 = sbr.rel (0) target = $region5
  $region4: #{tile.8} parent=0 // pred_region
    _
  $region5: #{tile.8} parent=0 // pred_fallthru
    _
  %v4 = vld [vmem:[%s0] ss:$0 sm:$0xff]
  %5 = vst [vmem:[%s1] sm:$0x3] %v4

// kernel: tile.9
$region0: #{tile.9}
  %s0 = inlined_call_operand.vmem [shape: f32[2,8], index: 0, kind: input, shape index: {}]
  %s1 = inlined_call_operand.vmem [shape: f32[1,16], index: 1, kind: output, shape index: {}]
  $region1: #{tile.9} parent=0
    #allocation0 [shape = 'u8[4096]{0}', space=vmem, size = 0x1000, scoped, tag = 'scoped mem for output reshape']
    #allocation1 [shape = 'u8[4096]{0}', space=vmem, size = 0x1000, scoped, tag = 'scoped mem for input reshape']
    %s3 = sshll.u32 1, 2
    %s4 = ssub.s32 %s3, 1
    %v5 = vld [vmem:[%s0] sm:%s4]
    %6 = vst [vmem:[#allocation1] sm:%s4] %v5
    %v7 = vld [vmem:[#allocation1] sm:$0x1]
    %vm8 = vcmask 64512
    %9 = vst.msk [vmem:[#allocation0] sm:$0x1] %vm8, %v7
    %s10 = scalar_lea.vmem [#allocation1], 1
    %v11 = vld [vmem:[%s10] sm:$0x1]
    %12 = vrot.lane.b32.xlu0 %v11, 8
    %v13 = vpop.permute.xlu0 %12
    %vm14 = vcmask 130112
    %15 = vst.msk [vmem:[#allocation0] sm:$0x1] %vm14, %v13
    %s17 = sshll.u32 1, 1
    %s18 = ssub.s32 %s17, 1
    %v20 = vld [vmem:[#allocation0] sm:%s18]
    %s21 = sshll.u32 1, 1
    %s22 = ssub.s32 %s21, 1
    %23 = vst [vmem:[%s1] sm:%s22] %v20

// kernel: upsample_block_forward.1
$region0: #{upsample_block_forward.1}
  #allocation0 [shape = 'u32[]', space=smem, size = 0x4, offset = 0x4, fixed_abs, tag = 'smem constant byte address 0x4 - core index']
  #allocation1 [shape = 'u32[144,128]{1,0:T(1,128)}', space=vmem, size = 0x12000, scoped, tag = 'internal scratch']
  #allocation2 [shape = 'bf16[288,12]{1,0:T(8,128)(2,1)}', space=vmem, size = 0x12000, scoped, tag = 'scratch operand']
  %s0 = inlined_call_operand.vmem [shape: bf16[2,18,18,4], index: 0, kind: input, shape index: {}, may-alias: {0,1}]
  %s1 = inlined_call_operand.vmem [shape: bf16[2,18,18,4], index: 1, kind: input, shape index: {}, may-alias: {0,1}]
  %s2 = inlined_call_operand.vmem [shape: bf16[2,2,12,16], index: 2, kind: input, shape index: {}]
  %s3 = inlined_call_operand.vmem [shape: f32[1,16], index: 3, kind: input, shape index: {}]
  %s4 = inlined_call_operand.vmem [shape: bf16[2,16,2,16,16], index: 4, kind: output, shape index: {}]
  %s5 = sld [smem:[#allocation0]]
  $region49: #{upsample_block_forward.1} parent=0
    _
  %s7 = ssub.s32 1, %s5
  %s8 = scalar_select 0, %s7, %s5
  loop: start=0, step=1, limit=4
  $region2: #{upsample_block_forward.1} parent=0 // loop_pre_header
    _
  $region3: #{upsample_block_forward.1} parent=0 // loop_header
    %s10 = sphi 0, %s14
    %p11 = scmp.ge.s32.totalorder %s10, 4
    %s17 = sphi 0, %s29
    %s18 = sphi 0, %s25
    %s19 = sphi 0, %s17
    %s20 = sphi 0, %s18
    %s21 = sphi 0, %s19
    %s22 = sphi 0, %s20
    %s34 = sphi 0, %s36
    %s37 = sphi 0, %s34
    %s38 = sphi 0, %s37
    %s54 = sphi 0, %s38
    %s66 = sphi 0, %s68
    %s69 = sphi 0, %s66
    %s70 = sphi 0, %s69
    %s86 = sphi 0, %s70
    %s90 = sphi 0, %s90
    %s92 = sphi 0, %s90
    %s93 = sphi 0, %s92
    %s107 = sphi 0, %s93
    %s111 = sphi 0, %s111
    %s113 = sphi 0, %s111
    %s114 = sphi 0, %s113
    %s128 = sphi 0, %s114
    %s136 = sphi 0, %s138
    %s139 = sphi 0, %s136
    %s140 = sphi 0, %s139
    %s156 = sphi 0, %s140
  $region4: #{upsample_block_forward.1} parent=0 // loop_header_branch
    %13 = sbr.rel (%p11) target = $region8
  $region5: #{upsample_block_forward.1} parent=0 // loop_body
    %s15 = ssub.s32 %s10, 1
    %s16 = ssub.s32 %s10, 2
    %s23 = sadd.s32 1, %s18
    %p24 = scmp.ge.s32.totalorder %s23, 1
    %s25 = scalar_select %p24, 0, %s23
    %s26 = sadd.s32 1, %s17
    %s27 = scalar_select %p24, %s26, %s17
    %p28 = scmp.ge.s32.totalorder %s27, 2
    %s29 = scalar_select %p28, 0, %s27
    %s30 = ssub.s32 %s17, %s29
    %s31 = ssub.s32 %s18, %s25
    %s32 = sor.u32 %s30, %s31
    %p33 = scmp.eq.s32.totalorder %s32, 0
    %s35 = sadd.s32 %s34, 1
    %s36 = scalar_select %p33, %s34, %s35
    %p39 = pneg %p33
    %p40 = scmp.eq.s32.totalorder %s10, 1
    %p41 = por %p39, %p40
    %p42 = scmp.ne.s32.totalorder %s34, %s37
    %p43 = scmp.eq.s32.totalorder %s10, 0
    %p44 = por %p42, %p43
    %p45 = scmp.ne.s32.totalorder %s34, %s37
    %p46 = scmp.eq.s32.totalorder %s15, 1
    %p47 = por %p45, %p46
    %p48 = scmp.ne.s32.totalorder %s37, %s38
    %p49 = scmp.eq.s32.totalorder %s15, 0
    %p50 = por %p48, %p49
    %p51 = scmp.ne.s32.totalorder %s37, %s38
    %p52 = scmp.eq.s32.totalorder %s16, 1
    %p53 = por %p51, %p52
    %p55 = scmp.ne.s32.totalorder %s38, %s54
    %p56 = scmp.eq.s32.totalorder %s16, 0
    %p57 = por %p55, %p56
    %s58 = sadd.s32 %s18, 1
    %s59 = smul.u32 %s58, 8
    %s60 = sadd.s32 %s25, 1
    %s61 = smul.u32 %s60, 8
    %s62 = ssub.s32 %s17, %s29
    %s63 = ssub.s32 %s59, %s61
    %s64 = sor.u32 %s62, %s63
    %p65 = scmp.eq.s32.totalorder %s64, 0
    %s67 = sadd.s32 %s66, 1
    %s68 = scalar_select %p65, %s66, %s67
    %p71 = pneg %p65
    %p72 = scmp.eq.s32.totalorder %s10, 1
    %p73 = por %p71, %p72
    %p74 = scmp.ne.s32.totalorder %s66, %s69
    %p75 = scmp.eq.s32.totalorder %s10, 0
    %p76 = por %p74, %p75
    %p77 = scmp.ne.s32.totalorder %s66, %s69
    %p78 = scmp.eq.s32.totalorder %s15, 1
    %p79 = por %p77, %p78
    %p80 = scmp.ne.s32.totalorder %s69, %s70
    %p81 = scmp.eq.s32.totalorder %s15, 0
    %p82 = por %p80, %p81
    %p83 = scmp.ne.s32.totalorder %s69, %s70
    %p84 = scmp.eq.s32.totalorder %s16, 1
    %p85 = por %p83, %p84
    %p87 = scmp.ne.s32.totalorder %s70, %s86
    %p88 = scmp.eq.s32.totalorder %s16, 0
    %p89 = por %p87, %p88
    %s91 = sadd.s32 %s90, 1
    %p94 = scmp.eq.s32.totalorder %s10, 1
    %p95 = scmp.ne.s32.totalorder %s90, %s92
    %p96 = scmp.eq.s32.totalorder %s10, 0
    %p97 = por %p95, %p96
    %p98 = scmp.ne.s32.totalorder %s90, %s92
    %p99 = scmp.eq.s32.totalorder %s15, 1
    %p100 = por %p98, %p99
    %p101 = scmp.ne.s32.totalorder %s92, %s93
    %p102 = scmp.eq.s32.totalorder %s15, 0
    %p103 = por %p101, %p102
    %p104 = scmp.ne.s32.totalorder %s92, %s93
    %p105 = scmp.eq.s32.totalorder %s16, 1
    %p106 = por %p104, %p105
    %p108 = scmp.ne.s32.totalorder %s93, %s107
    %p109 = scmp.eq.s32.totalorder %s16, 0
    %p110 = por %p108, %p109
    %s112 = sadd.s32 %s111, 1
    %p115 = scmp.eq.s32.totalorder %s10, 1
    %p116 = scmp.ne.s32.totalorder %s111, %s113
    %p117 = scmp.eq.s32.totalorder %s10, 0
    %p118 = por %p116, %p117
    %p119 = scmp.ne.s32.totalorder %s111, %s113
    %p120 = scmp.eq.s32.totalorder %s15, 1
    %p121 = por %p119, %p120
    %p122 = scmp.ne.s32.totalorder %s113, %s114
    %p123 = scmp.eq.s32.totalorder %s15, 0
    %p124 = por %p122, %p123
    %p125 = scmp.ne.s32.totalorder %s113, %s114
    %p126 = scmp.eq.s32.totalorder %s16, 1
    %p127 = por %p125, %p126
    %p129 = scmp.ne.s32.totalorder %s114, %s128
    %p130 = scmp.eq.s32.totalorder %s16, 0
    %p131 = por %p129, %p130
    %s132 = ssub.s32 %s17, %s29
    %s133 = ssub.s32 %s18, %s25
    %s134 = sor.u32 %s132, %s133
    %p135 = scmp.eq.s32.totalorder %s134, 0
    %s137 = sadd.s32 %s136, 1
    %s138 = scalar_select %p135, %s136, %s137
    %p141 = pneg %p135
    %p142 = scmp.eq.s32.totalorder %s10, 1
    %p143 = por %p141, %p142
    %p144 = scmp.ne.s32.totalorder %s136, %s139
    %p145 = scmp.eq.s32.totalorder %s10, 0
    %p146 = por %p144, %p145
    %p147 = scmp.ne.s32.totalorder %s136, %s139
    %p148 = scmp.eq.s32.totalorder %s15, 1
    %p149 = por %p147, %p148
    %p150 = scmp.ne.s32.totalorder %s139, %s140
    %p151 = scmp.eq.s32.totalorder %s15, 0
    %p152 = por %p150, %p151
    %p153 = scmp.ne.s32.totalorder %s139, %s140
    %p154 = scmp.eq.s32.totalorder %s16, 1
    %p155 = por %p153, %p154
    %p157 = scmp.ne.s32.totalorder %s140, %s156
    %p158 = scmp.eq.s32.totalorder %s16, 0
    %p159 = por %p157, %p158
    %p160 = scmp.le.s32.totalorder 1, %s10
    %p161 = scmp.lt.s32.totalorder %s10, 3
    %p162 = pnand %p160, %p161
    %p163 = pneg %p162
    // Predicated region
    $region9: #{upsample_block_forward.1} parent=5 // pred_check
      _
    $region10: #{upsample_block_forward.1} parent=5 // pred_check_branch
      %165 = sbr.rel (%p162) target = $region12
    $region11: #{upsample_block_forward.1} parent=5 // pred_region
      %s166 = ssub.s32 %s10, 1
      // Predicated region
      $region13: #{upsample_block_forward.1} parent=11 // pred_check
        %p167 = pneg %p103
      $region14: #{upsample_block_forward.1} parent=11 // pred_check_branch
        %169 = sbr.rel (%p167) target = $region16
      $region15: #{upsample_block_forward.1} parent=11 // pred_region
        _
      $region16: #{upsample_block_forward.1} parent=11 // pred_fallthru
        _
      // Predicated region
      $region17: #{upsample_block_forward.1} parent=11 // pred_check
        %p170 = pneg %p124
      $region18: #{upsample_block_forward.1} parent=11 // pred_check_branch
        %172 = sbr.rel (%p170) target = $region20
      $region19: #{upsample_block_forward.1} parent=11 // pred_region
        _
      $region20: #{upsample_block_forward.1} parent=11 // pred_fallthru
        _
    $region12: #{upsample_block_forward.1} parent=5 // pred_fallthru
      _
    %p173 = scmp.lt.s32.totalorder %s10, 2
    // Predicated region
    $region21: #{upsample_block_forward.1} parent=5 // pred_check
      %p174 = pneg %p173
    $region22: #{upsample_block_forward.1} parent=5 // pred_check_branch
      %176 = sbr.rel (%p174) target = $region24
    $region23: #{upsample_block_forward.1} parent=5 // pred_region
      // Predicated region
      $region25: #{upsample_block_forward.1} parent=23 // pred_check
        %p177 = pneg %p44
      $region26: #{upsample_block_forward.1} parent=23 // pred_check_branch
        %179 = sbr.rel (%p177) target = $region28
      $region27: #{upsample_block_forward.1} parent=23 // pred_region
        %s180 = smul.u32 16, %s18
        %s181 = ssub.s32 18, %s180
        %p182 = scmp.lt.s32.totalorder %s181, 16
        %s183 = scalar_select %p182, %s181, 16
        %s184 = smul.u32 64, %s183
        %s185 = smul.u32 %s184, 3
        %p186 = scmp.lt.s32.totalorder %s17, 1
        %s187 = scalar_select %p186, %s17, 1
        %p188 = scmp.lt.s32.totalorder %s180, 17
        %s189 = scalar_select %p188, %s180, 17
        %s190 = smul.addr %s189, 3
        %s191 = smul.addr %s187, 54
        %s192 = sadd.s32 %s190, %s191
        %s193 = smul.addr %s192, 4
        %s194 = scalar_lea.vmem %s0, %s193
        %s195 = smul.u32 16, %s18
        %s196 = ssub.s32 18, %s195
        %p197 = scmp.lt.s32.totalorder %s196, 16
        %s198 = scalar_select %p197, %s196, 16
        %s199 = smul.u32 64, %s198
        %s200 = smul.u32 %s199, 3
      $region28: #{upsample_block_forward.1} parent=23 // pred_fallthru
        _
      // Predicated region
      $region29: #{upsample_block_forward.1} parent=23 // pred_check
        %p201 = pneg %p76
      $region30: #{upsample_block_forward.1} parent=23 // pred_check_branch
        %203 = sbr.rel (%p201) target = $region32
      $region31: #{upsample_block_forward.1} parent=23 // pred_region
        %s204 = sadd.s32 %s18, 1
        %s205 = smul.u32 %s204, 8
        %s206 = smul.u32 2, %s205
        %p207 = scmp.lt.s32.totalorder %s17, 1
        %s208 = scalar_select %p207, %s17, 1
        %p209 = scmp.lt.s32.totalorder %s206, 17
        %s210 = scalar_select %p209, %s206, 17
        %s211 = smul.addr %s210, 3
        %s212 = smul.addr %s208, 54
        %s213 = sadd.s32 %s211, %s212
        %s214 = smul.addr %s213, 4
        %s215 = scalar_lea.vmem %s1, %s214
        %s216 = sadd.s32 %s18, 1
        %s217 = smul.u32 %s216, 8
        %s218 = smul.u32 2, %s217
      $region32: #{upsample_block_forward.1} parent=23 // pred_fallthru
        _
    $region24: #{upsample_block_forward.1} parent=5 // pred_fallthru
      _
    %p219 = scmp.le.s32.totalorder 1, %s10
    %p220 = scmp.lt.s32.totalorder %s10, 3
    %p221 = pnand %p219, %p220
    %p222 = pneg %p221
    // Predicated region
    $region33: #{upsample_block_forward.1} parent=5 // pred_check
      _
    $region34: #{upsample_block_forward.1} parent=5 // pred_check_branch
      %224 = sbr.rel (%p221) target = $region36
    $region35: #{upsample_block_forward.1} parent=5 // pred_region
      %s225 = ssub.s32 %s10, 1
      %s226 = smul.u32 16, %s20
      %s227 = ssub.s32 18, %s226
      %p228 = scmp.lt.s32.totalorder %s227, 16
      %s229 = scalar_select %p228, %s227, 16
      %s230 = smul.u32 64, %s229
      %s231 = smul.u32 %s230, 3
      %p232 = scmp.lt.s32.totalorder %s19, 1
      %s233 = scalar_select %p232, %s19, 1
      %p234 = scmp.lt.s32.totalorder %s226, 17
      %s235 = scalar_select %p234, %s226, 17
      %s236 = smul.addr %s235, 3
      %s237 = smul.addr %s233, 54
      %s238 = sadd.s32 %s236, %s237
      %s239 = smul.addr %s238, 4
      %s240 = scalar_lea.vmem %s0, %s239
      %p241 = pneg %p50
      %p242 = pneg %p47
      %s243 = sadd.s32 %s20, 1
      %s244 = smul.u32 %s243, 8
      %s245 = smul.u32 2, %s244
      %p246 = scmp.lt.s32.totalorder %s19, 1
      %s247 = scalar_select %p246, %s19, 1
      %p248 = scmp.lt.s32.totalorder %s245, 17
      %s249 = scalar_select %p248, %s245, 17
      %s250 = smul.addr %s249, 3
      %s251 = smul.addr %s247, 54
      %s252 = sadd.s32 %s250, %s251
      %s253 = smul.addr %s252, 4
      %s254 = scalar_lea.vmem %s1, %s253
      %p255 = pneg %p82
      %p256 = pneg %p79
      %p257 = pneg %p103
      %p258 = pneg %p100
      %p259 = pneg %p124
      %p260 = pneg %p121
      %p261 = pneg %p152
      %p262 = pneg %p149
      %s263 = smul.u32 16, %s20
      %p264 = scmp.lt.s32.totalorder %s19, 1
      %s265 = scalar_select %p264, %s19, 1
      %p266 = scmp.lt.s32.totalorder %s263, 15
      %s267 = scalar_select %p266, %s263, 15
      %s268 = smul.addr %s267, 4
      %s269 = smul.addr %s265, 64
      %s270 = sadd.s32 %s268, %s269
      %s271 = smul.addr %s270, 4
      %s272 = scalar_lea.vmem %s4, %s271
      %s273 = smul.u32 16, %s20
      %s274 = ssub.s32 18, %s273
      %p275 = scmp.lt.s32.totalorder %s274, 16
      %s276 = scalar_select %p275, %s274, 16
      %s277 = smul.u32 64, %s276
      %s278 = smul.u32 %s277, 3
      %p279 = scmp.lt.s32.totalorder %s19, 1
      %s280 = scalar_select %p279, %s19, 1
      %p281 = scmp.lt.s32.totalorder %s273, 17
      %s282 = scalar_select %p281, %s273, 17
      %s283 = smul.addr %s282, 3
      %s284 = smul.addr %s280, 54
      %s285 = sadd.s32 %s283, %s284
      %s286 = smul.addr %s285, 4
      %s287 = scalar_lea.vmem %s0, %s286
      %s288 = smul.u32 16, %s20
      %s289 = ssub.s32 18, %s288
      %p290 = scmp.lt.s32.totalorder %s289, 16
      %s291 = scalar_select %p290, %s289, 16
      %s292 = smul.u32 64, %s291
      %s293 = smul.u32 %s292, 3
      %s294 = sadd.s32 %s20, 1
      %s295 = smul.u32 %s294, 8
      %s296 = smul.u32 2, %s295
      %p297 = scmp.lt.s32.totalorder %s19, 1
      %s298 = scalar_select %p297, %s19, 1
      %p299 = scmp.lt.s32.totalorder %s296, 17
      %s300 = scalar_select %p299, %s296, 17
      %s301 = smul.addr %s300, 3
      %s302 = smul.addr %s298, 54
      %s303 = sadd.s32 %s301, %s302
      %s304 = smul.addr %s303, 4
      %s305 = scalar_lea.vmem %s1, %s304
      %s306 = sadd.s32 %s20, 1
      %s307 = smul.u32 %s306, 8
      %s308 = smul.u32 2, %s307
      %s309 = smul.u32 16, %s20
      %p310 = scmp.lt.s32.totalorder %s19, 1
      %s311 = scalar_select %p310, %s19, 1
      %p312 = scmp.lt.s32.totalorder %s309, 15
      %s313 = scalar_select %p312, %s309, 15
      %s314 = smul.addr %s313, 4
      %s315 = smul.addr %s311, 64
      %s316 = sadd.s32 %s314, %s315
      %s317 = smul.addr %s316, 4
      %s318 = scalar_lea.vmem %s4, %s317
      %s319 = smul.u32 16, %s20
      %v321 = vld [vmem:[%s287] sm:$0xf]
      %v322 = vld [vmem:[%s287 + $0x4] sm:$0xf]
      %v323 = vld [vmem:[%s287 + $0xc] sm:$0xf]
      %v324 = vld [vmem:[%s287 + $0x10] sm:$0xf]
      %v325 = vld [vmem:[%s287 + $0x18] sm:$0xf]
      %v326 = vld [vmem:[%s287 + $0x1c] sm:$0xf]
      %v327 = vld [vmem:[%s287 + $0x24] sm:$0xf]
      %v328 = vld [vmem:[%s287 + $0x28] sm:$0xf]
      %v329 = vld [vmem:[%s287 + $0x30] sm:$0xf]
      %v330 = vld [vmem:[%s287 + $0x34] sm:$0xf]
      %v331 = vld [vmem:[%s287 + $0x3c] sm:$0xf]
      %v332 = vld [vmem:[%s287 + $0x40] sm:$0xf]
      %v333 = vld [vmem:[%s287 + $0x48] sm:$0xf]
      %v334 = vld [vmem:[%s287 + $0x4c] sm:$0xf]
      %v335 = vld [vmem:[%s287 + $0x54] sm:$0xf]
      %v336 = vld [vmem:[%s287 + $0x58] sm:$0xf]
      %v337 = vld [vmem:[%s287 + $0x60] sm:$0xf]
      %v338 = vld [vmem:[%s287 + $0x64] sm:$0xf]
      %v339 = vld [vmem:[%s287 + $0x6c] sm:$0xf]
      %v340 = vld [vmem:[%s287 + $0x70] sm:$0xf]
      %v341 = vld [vmem:[%s287 + $0x78] sm:$0xf]
      %v342 = vld [vmem:[%s287 + $0x7c] sm:$0xf]
      %v343 = vld [vmem:[%s287 + $0x84] sm:$0xf]
      %v344 = vld [vmem:[%s287 + $0x88] sm:$0xf]
      %v345 = vld [vmem:[%s287 + $0x90] sm:$0xf]
      %v346 = vld [vmem:[%s287 + $0x94] sm:$0xf]
      %v347 = vld [vmem:[%s287 + $0x9c] sm:$0xf]
      %v348 = vld [vmem:[%s287 + $0xa0] sm:$0xf]
      %v349 = vld [vmem:[%s287 + $0xa8] sm:$0xf]
      %v350 = vld [vmem:[%s287 + $0xac] sm:$0xf]
      %v351 = vld [vmem:[%s287 + $0xb4] sm:$0xf]
      %v352 = vld [vmem:[%s287 + $0xb8] sm:$0xf]
      %vm353 = vcmask 27648
      %354 = vst.msk [vmem:[#allocation2] sm:$0xf] %vm353, %v321
      %355 = vst.msk [vmem:[#allocation2 + $0x4] sm:$0xf] %vm353, %v322
      %356 = vst.msk [vmem:[#allocation2 + $0x8] sm:$0xf] %vm353, %v323
      %357 = vst.msk [vmem:[#allocation2 + $0xc] sm:$0xf] %vm353, %v324
      %358 = vst.msk [vmem:[#allocation2 + $0x10] sm:$0xf] %vm353, %v325
      %359 = vst.msk [vmem:[#allocation2 + $0x14] sm:$0xf] %vm353, %v326
      %360 = vst.msk [vmem:[#allocation2 + $0x18] sm:$0xf] %vm353, %v327
      %361 = vst.msk [vmem:[#allocation2 + $0x1c] sm:$0xf] %vm353, %v328
      %362 = vst.msk [vmem:[#allocation2 + $0x20] sm:$0xf] %vm353, %v329
      %363 = vst.msk [vmem:[#allocation2 + $0x24] sm:$0xf] %vm353, %v330
      %364 = vst.msk [vmem:[#allocation2 + $0x28] sm:$0xf] %vm353, %v331
      %365 = vst.msk [vmem:[#allocation2 + $0x2c] sm:$0xf] %vm353, %v332
      %366 = vst.msk [vmem:[#allocation2 + $0x30] sm:$0xf] %vm353, %v333
      %367 = vst.msk [vmem:[#allocation2 + $0x34] sm:$0xf] %vm353, %v334
      %368 = vst.msk [vmem:[#allocation2 + $0x38] sm:$0xf] %vm353, %v335
      %369 = vst.msk [vmem:[#allocation2 + $0x3c] sm:$0xf] %vm353, %v336
      %370 = vst.msk [vmem:[#allocation2 + $0x40] sm:$0xf] %vm353, %v337
      %371 = vst.msk [vmem:[#allocation2 + $0x44] sm:$0xf] %vm353, %v338
      %372 = vst.msk [vmem:[#allocation2 + $0x48] sm:$0xf] %vm353, %v339
      %373 = vst.msk [vmem:[#allocation2 + $0x4c] sm:$0xf] %vm353, %v340
      %374 = vst.msk [vmem:[#allocation2 + $0x50] sm:$0xf] %vm353, %v341
      %375 = vst.msk [vmem:[#allocation2 + $0x54] sm:$0xf] %vm353, %v342
      %376 = vst.msk [vmem:[#allocation2 + $0x58] sm:$0xf] %vm353, %v343
      %377 = vst.msk [vmem:[#allocation2 + $0x5c] sm:$0xf] %vm353, %v344
      %378 = vst.msk [vmem:[#allocation2 + $0x60] sm:$0xf] %vm353, %v345
      %379 = vst.msk [vmem:[#allocation2 + $0x64] sm:$0xf] %vm353, %v346
      %380 = vst.msk [vmem:[#allocation2 + $0x68] sm:$0xf] %vm353, %v347
      %381 = vst.msk [vmem:[#allocation2 + $0x6c] sm:$0xf] %vm353, %v348
      %382 = vst.msk [vmem:[#allocation2 + $0x70] sm:$0xf] %vm353, %v349
      %383 = vst.msk [vmem:[#allocation2 + $0x74] sm:$0xf] %vm353, %v350
      %384 = vst.msk [vmem:[#allocation2 + $0x78] sm:$0xf] %vm353, %v351
      %385 = vst.msk [vmem:[#allocation2 + $0x7c] sm:$0xf] %vm353, %v352
      %v386 = vld [vmem:[%s305] sm:$0xf]
      %v387 = vld [vmem:[%s305 + $0x4] sm:$0xf]
      %v388 = vld [vmem:[%s305 + $0xc] sm:$0xf]
      %v389 = vld [vmem:[%s305 + $0x10] sm:$0xf]
      %390 = vst.msk [vmem:[#allocation2 + $0x80] sm:$0xf] %vm353, %v386
      %391 = vst.msk [vmem:[#allocation2 + $0x84] sm:$0xf] %vm353, %v387
      %392 = vst.msk [vmem:[#allocation2 + $0x88] sm:$0xf] %vm353, %v388
      %393 = vst.msk [vmem:[#allocation2 + $0x8c] sm:$0xf] %vm353, %v389
      %v394 = vld [vmem:[%s287] sm:$0xf]
      %v395 = vld [vmem:[%s287 + $0x4] sm:$0xf]
      %v396 = vld [vmem:[%s287 + $0x8] sm:$0x1]
      %v397 = vld [vmem:[%s287 + $0xc] sm:$0xf]
      %v398 = vld [vmem:[%s287 + $0x10] sm:$0xf]
      %v399 = vld [vmem:[%s287 + $0x14] sm:$0x1]
      %v400 = vld [vmem:[%s287 + $0x18] sm:$0xf]
      %v401 = vld [vmem:[%s287 + $0x1c] sm:$0xf]
      %v402 = vld [vmem:[%s287 + $0x20] sm:$0x1]
      %v403 = vld [vmem:[%s287 + $0x24] sm:$0xf]
      %v404 = vld [vmem:[%s287 + $0x28] sm:$0xf]
      %v405 = vld [vmem:[%s287 + $0x2c] sm:$0x1]
      %v406 = vld [vmem:[%s287 + $0x30] sm:$0xf]
      %v407 = vld [vmem:[%s287 + $0x34] sm:$0xf]
      %v408 = vld [vmem:[%s287 + $0x38] sm:$0x1]
      %v409 = vld [vmem:[%s287 + $0x3c] sm:$0xf]
      %v410 = vld [vmem:[%s287 + $0x40] sm:$0xf]
      %v411 = vld [vmem:[%s287 + $0x44] sm:$0x1]
      %v412 = vld [vmem:[%s287 + $0x48] sm:$0xf]
      %v413 = vld [vmem:[%s287 + $0x4c] sm:$0xf]
      %v414 = vld [vmem:[%s287 + $0x50] sm:$0x1]
      %v415 = vld [vmem:[%s287 + $0x54] sm:$0xf]
      %v416 = vld [vmem:[%s287 + $0x58] sm:$0xf]
      %v417 = vld [vmem:[%s287 + $0x5c] sm:$0x1]
      %v418 = vld [vmem:[%s287 + $0x60] sm:$0xf]
      %v419 = vld [vmem:[%s287 + $0x64] sm:$0xf]
      %v420 = vld [vmem:[%s287 + $0x68] sm:$0x1]
      %v421 = vld [vmem:[%s287 + $0x6c] sm:$0xf]
      %v422 = vld [vmem:[%s287 + $0x70] sm:$0xf]
      %v423 = vld [vmem:[%s287 + $0x74] sm:$0x1]
      %v424 = vld [vmem:[%s287 + $0x78] sm:$0xf]
      %v425 = vld [vmem:[%s287 + $0x7c] sm:$0xf]
      %v426 = vld [vmem:[%s287 + $0x80] sm:$0x1]
      %v427 = vld [vmem:[%s287 + $0x84] sm:$0xf]
      %v428 = vld [vmem:[%s287 + $0x88] sm:$0xf]
      %v429 = vld [vmem:[%s287 + $0x8c] sm:$0x1]
      %v430 = vld [vmem:[%s287 + $0x90] sm:$0xf]
      %v431 = vld [vmem:[%s287 + $0x94] sm:$0xf]
      %v432 = vld [vmem:[%s287 + $0x98] sm:$0x1]
      %v433 = vld [vmem:[%s287 + $0x9c] sm:$0xf]
      %v434 = vld [vmem:[%s287 + $0xa0] sm:$0xf]
      %v435 = vld [vmem:[%s287 + $0xa4] sm:$0x1]
      %v436 = vld [vmem:[%s287 + $0xa8] sm:$0xf]
      %v437 = vld [vmem:[%s287 + $0xac] sm:$0xf]
      %v438 = vld [vmem:[%s287 + $0xb0] sm:$0x1]
      %v439 = vld [vmem:[%s287 + $0xb4] sm:$0xf]
      %v440 = vld [vmem:[%s287 + $0xb8] sm:$0xf]
      %v441 = vld [vmem:[%s287 + $0xbc] sm:$0x1]
      %vm442 = vsmask.f32 3328
      %vm443 = vsmask.f32 7440
      %vm444 = vmor %vm442, %vm443
      %v446 = vshrl.u32 %v394, 16
      %v448 = vrot.slane %v446, 4
      %v449 = vshll.u32 %v394, 16
      %v451 = vrot.slane %v449, 5
      %v452 = vor.u32 %v448, %v451
      %v453 = vrot.slane %v452, 4
      %v455 = vshll.u32 %v395, 16
      %v457 = vrot.slane %v455, 5
      %v458 = vsel %vm444, %v453, %v457
      %v459 = vshrl.u32 %v395, 16
      %v461 = vrot.slane %v459, 4
      %v462 = vor.u32 %v461, %v457
      %v463 = vrot.slane %v462, 4
      %v465 = vshll.u32 %v396, 16
      %v467 = vrot.slane %v465, 5
      %v468 = vsel %vm444, %v463, %v467
      %v470 = vshrl.u32 %v397, 16
      %v472 = vrot.slane %v470, 4
      %v473 = vshll.u32 %v397, 16
      %v475 = vrot.slane %v473, 5
      %v476 = vor.u32 %v472, %v475
      %v477 = vrot.slane %v476, 4
      %v479 = vshll.u32 %v398, 16
      %v481 = vrot.slane %v479, 5
      %v482 = vsel %vm444, %v477, %v481
      %v483 = vshrl.u32 %v398, 16
      %v485 = vrot.slane %v483, 4
      %v486 = vor.u32 %v485, %v481
      %v487 = vrot.slane %v486, 4
      %v489 = vshll.u32 %v399, 16
      %v491 = vrot.slane %v489, 5
      %v492 = vsel %vm444, %v487, %v491
      %v494 = vshrl.u32 %v400, 16
      %v496 = vrot.slane %v494, 4
      %v497 = vshll.u32 %v400, 16
      %v499 = vrot.slane %v497, 5
      %v500 = vor.u32 %v496, %v499
      %v501 = vrot.slane %v500, 4
      %v503 = vshll.u32 %v401, 16
      %v505 = vrot.slane %v503, 5
      %v506 = vsel %vm444, %v501, %v505
      %v507 = vshrl.u32 %v401, 16
      %v509 = vrot.slane %v507, 4
      %v510 = vor.u32 %v509, %v505
      %v511 = vrot.slane %v510, 4
      %v513 = vshll.u32 %v402, 16
      %v515 = vrot.slane %v513, 5
      %v516 = vsel %vm444, %v511, %v515
      %v518 = vshrl.u32 %v403, 16
      %v520 = vrot.slane %v518, 4
      %v521 = vshll.u32 %v403, 16
      %v523 = vrot.slane %v521, 5
      %v524 = vor.u32 %v520, %v523
      %v525 = vrot.slane %v524, 4
      %v527 = vshll.u32 %v404, 16
      %v529 = vrot.slane %v527, 5
      %v530 = vsel %vm444, %v525, %v529
      %v531 = vshrl.u32 %v404, 16
      %v533 = vrot.slane %v531, 4
      %v534 = vor.u32 %v533, %v529
      %v535 = vrot.slane %v534, 4
      %v537 = vshll.u32 %v405, 16
      %v539 = vrot.slane %v537, 5
      %v540 = vsel %vm444, %v535, %v539
      %v542 = vshrl.u32 %v406, 16
      %v544 = vrot.slane %v542, 4
      %v545 = vshll.u32 %v406, 16
      %v547 = vrot.slane %v545, 5
      %v548 = vor.u32 %v544, %v547
      %v549 = vrot.slane %v548, 4
      %v551 = vshll.u32 %v407, 16
      %v553 = vrot.slane %v551, 5
      %v554 = vsel %vm444, %v549, %v553
      %v555 = vshrl.u32 %v407, 16
      %v557 = vrot.slane %v555, 4
      %v558 = vor.u32 %v557, %v553
      %v559 = vrot.slane %v558, 4
      %v561 = vshll.u32 %v408, 16
      %v563 = vrot.slane %v561, 5
      %v564 = vsel %vm444, %v559, %v563
      %v566 = vshrl.u32 %v409, 16
      %v568 = vrot.slane %v566, 4
      %v569 = vshll.u32 %v409, 16
      %v571 = vrot.slane %v569, 5
      %v572 = vor.u32 %v568, %v571
      %v573 = vrot.slane %v572, 4
      %v575 = vshll.u32 %v410, 16
      %v577 = vrot.slane %v575, 5
      %v578 = vsel %vm444, %v573, %v577
      %v579 = vshrl.u32 %v410, 16
      %v581 = vrot.slane %v579, 4
      %v582 = vor.u32 %v581, %v577
      %v583 = vrot.slane %v582, 4
      %v585 = vshll.u32 %v411, 16
      %v587 = vrot.slane %v585, 5
      %v588 = vsel %vm444, %v583, %v587
      %v590 = vshrl.u32 %v412, 16
      %v592 = vrot.slane %v590, 4
      %v593 = vshll.u32 %v412, 16
      %v595 = vrot.slane %v593, 5
      %v596 = vor.u32 %v592, %v595
      %v597 = vrot.slane %v596, 4
      %v599 = vshll.u32 %v413, 16
      %v601 = vrot.slane %v599, 5
      %v602 = vsel %vm444, %v597, %v601
      %v603 = vshrl.u32 %v413, 16
      %v605 = vrot.slane %v603, 4
      %v606 = vor.u32 %v605, %v601
      %v607 = vrot.slane %v606, 4
      %v609 = vshll.u32 %v414, 16
      %v611 = vrot.slane %v609, 5
      %v612 = vsel %vm444, %v607, %v611
      %v614 = vshrl.u32 %v415, 16
      %v616 = vrot.slane %v614, 4
      %v617 = vshll.u32 %v415, 16
      %v619 = vrot.slane %v617, 5
      %v620 = vor.u32 %v616, %v619
      %v621 = vrot.slane %v620, 4
      %v623 = vshll.u32 %v416, 16
      %v625 = vrot.slane %v623, 5
      %v626 = vsel %vm444, %v621, %v625
      %v627 = vshrl.u32 %v416, 16
      %v629 = vrot.slane %v627, 4
      %v630 = vor.u32 %v629, %v625
      %v631 = vrot.slane %v630, 4
      %v633 = vshll.u32 %v417, 16
      %v635 = vrot.slane %v633, 5
      %v636 = vsel %vm444, %v631, %v635
      %v638 = vshrl.u32 %v418, 16
      %v640 = vrot.slane %v638, 4
      %v641 = vshll.u32 %v418, 16
      %v643 = vrot.slane %v641, 5
      %v644 = vor.u32 %v640, %v643
      %v645 = vrot.slane %v644, 4
      %v647 = vshll.u32 %v419, 16
      %v649 = vrot.slane %v647, 5
      %v650 = vsel %vm444, %v645, %v649
      %v651 = vshrl.u32 %v419, 16
      %v653 = vrot.slane %v651, 4
      %v654 = vor.u32 %v653, %v649
      %v655 = vrot.slane %v654, 4
      %v657 = vshll.u32 %v420, 16
      %v659 = vrot.slane %v657, 5
      %v660 = vsel %vm444, %v655, %v659
      %v662 = vshrl.u32 %v421, 16
      %v664 = vrot.slane %v662, 4
      %v665 = vshll.u32 %v421, 16
      %v667 = vrot.slane %v665, 5
      %v668 = vor.u32 %v664, %v667
      %v669 = vrot.slane %v668, 4
      %v671 = vshll.u32 %v422, 16
      %v673 = vrot.slane %v671, 5
      %v674 = vsel %vm444, %v669, %v673
      %v675 = vshrl.u32 %v422, 16
      %v677 = vrot.slane %v675, 4
      %v678 = vor.u32 %v677, %v673
      %v679 = vrot.slane %v678, 4
      %v681 = vshll.u32 %v423, 16
      %v683 = vrot.slane %v681, 5
      %v684 = vsel %vm444, %v679, %v683
      %v686 = vshrl.u32 %v424, 16
      %v688 = vrot.slane %v686, 4
      %v689 = vshll.u32 %v424, 16
      %v691 = vrot.slane %v689, 5
      %v692 = vor.u32 %v688, %v691
      %v693 = vrot.slane %v692, 4
      %v695 = vshll.u32 %v425, 16
      %v697 = vrot.slane %v695, 5
      %v698 = vsel %vm444, %v693, %v697
      %v699 = vshrl.u32 %v425, 16
      %v701 = vrot.slane %v699, 4
      %v702 = vor.u32 %v701, %v697
      %v703 = vrot.slane %v702, 4
      %v705 = vshll.u32 %v426, 16
      %v707 = vrot.slane %v705, 5
      %v708 = vsel %vm444, %v703, %v707
      %v710 = vshrl.u32 %v427, 16
      %v712 = vrot.slane %v710, 4
      %v713 = vshll.u32 %v427, 16
      %v715 = vrot.slane %v713, 5
      %v716 = vor.u32 %v712, %v715
      %v717 = vrot.slane %v716, 4
      %v719 = vshll.u32 %v428, 16
      %v721 = vrot.slane %v719, 5
      %v722 = vsel %vm444, %v717, %v721
      %v723 = vshrl.u32 %v428, 16
      %v725 = vrot.slane %v723, 4
      %v726 = vor.u32 %v725, %v721
      %v727 = vrot.slane %v726, 4
      %v729 = vshll.u32 %v429, 16
      %v731 = vrot.slane %v729, 5
      %v732 = vsel %vm444, %v727, %v731
      %v734 = vshrl.u32 %v430, 16
      %v736 = vrot.slane %v734, 4
      %v737 = vshll.u32 %v430, 16
      %v739 = vrot.slane %v737, 5
      %v740 = vor.u32 %v736, %v739
      %v741 = vrot.slane %v740, 4
      %v743 = vshll.u32 %v431, 16
      %v745 = vrot.slane %v743, 5
      %v746 = vsel %vm444, %v741, %v745
      %v747 = vshrl.u32 %v431, 16
      %v749 = vrot.slane %v747, 4
      %v750 = vor.u32 %v749, %v745
      %v751 = vrot.slane %v750, 4
      %v753 = vshll.u32 %v432, 16
      %v755 = vrot.slane %v753, 5
      %v756 = vsel %vm444, %v751, %v755
      %v758 = vshrl.u32 %v433, 16
      %v760 = vrot.slane %v758, 4
      %v761 = vshll.u32 %v433, 16
      %v763 = vrot.slane %v761, 5
      %v764 = vor.u32 %v760, %v763
      %v765 = vrot.slane %v764, 4
      %v767 = vshll.u32 %v434, 16
      %v769 = vrot.slane %v767, 5
      %v770 = vsel %vm444, %v765, %v769
      %v771 = vshrl.u32 %v434, 16
      %v773 = vrot.slane %v771, 4
      %v774 = vor.u32 %v773, %v769
      %v775 = vrot.slane %v774, 4
      %v777 = vshll.u32 %v435, 16
      %v779 = vrot.slane %v777, 5
      %v780 = vsel %vm444, %v775, %v779
      %v782 = vshrl.u32 %v436, 16
      %v784 = vrot.slane %v782, 4
      %v785 = vshll.u32 %v436, 16
      %v787 = vrot.slane %v785, 5
      %v788 = vor.u32 %v784, %v787
      %v789 = vrot.slane %v788, 4
      %v791 = vshll.u32 %v437, 16
      %v793 = vrot.slane %v791, 5
      %v794 = vsel %vm444, %v789, %v793
      %v795 = vshrl.u32 %v437, 16
      %v797 = vrot.slane %v795, 4
      %v798 = vor.u32 %v797, %v793
      %v799 = vrot.slane %v798, 4
      %v801 = vshll.u32 %v438, 16
      %v803 = vrot.slane %v801, 5
      %v804 = vsel %vm444, %v799, %v803
      %v806 = vshrl.u32 %v439, 16
      %v808 = vrot.slane %v806, 4
      %v809 = vshll.u32 %v439, 16
      %v811 = vrot.slane %v809, 5
      %v812 = vor.u32 %v808, %v811
      %v813 = vrot.slane %v812, 4
      %v815 = vshll.u32 %v440, 16
      %v817 = vrot.slane %v815, 5
      %v818 = vsel %vm444, %v813, %v817
      %v819 = vshrl.u32 %v440, 16
      %v821 = vrot.slane %v819, 4
      %v822 = vor.u32 %v821, %v817
      %v823 = vrot.slane %v822, 4
      %v825 = vshll.u32 %v441, 16
      %v827 = vrot.slane %v825, 5
      %v828 = vsel %vm444, %v823, %v827
      %829 = vrot.lane.b32.xlu0 %v458, 4
      %v830 = vpop.permute.xlu0 %829
      %831 = vrot.lane.b32.xlu0 %v468, 4
      %v832 = vpop.permute.xlu0 %831
      %833 = vrot.lane.b32.xlu0 %v482, 4
      %v834 = vpop.permute.xlu0 %833
      %835 = vrot.lane.b32.xlu0 %v492, 4
      %v836 = vpop.permute.xlu0 %835
      %837 = vrot.lane.b32.xlu0 %v506, 4
      %v838 = vpop.permute.xlu0 %837
      %839 = vrot.lane.b32.xlu0 %v516, 4
      %v840 = vpop.permute.xlu0 %839
      %841 = vrot.lane.b32.xlu0 %v530, 4
      %v842 = vpop.permute.xlu0 %841
      %843 = vrot.lane.b32.xlu0 %v540, 4
      %v844 = vpop.permute.xlu0 %843
      %845 = vrot.lane.b32.xlu0 %v554, 4
      %v846 = vpop.permute.xlu0 %845
      %847 = vrot.lane.b32.xlu0 %v564, 4
      %v848 = vpop.permute.xlu0 %847
      %849 = vrot.lane.b32.xlu0 %v578, 4
      %v850 = vpop.permute.xlu0 %849
      %851 = vrot.lane.b32.xlu0 %v588, 4
      %v852 = vpop.permute.xlu0 %851
      %853 = vrot.lane.b32.xlu0 %v602, 4
      %v854 = vpop.permute.xlu0 %853
      %855 = vrot.lane.b32.xlu0 %v612, 4
      %v856 = vpop.permute.xlu0 %855
      %857 = vrot.lane.b32.xlu0 %v626, 4
      %v858 = vpop.permute.xlu0 %857
      %859 = vrot.lane.b32.xlu0 %v636, 4
      %v860 = vpop.permute.xlu0 %859
      %861 = vrot.lane.b32.xlu0 %v650, 4
      %v862 = vpop.permute.xlu0 %861
      %863 = vrot.lane.b32.xlu0 %v660, 4
      %v864 = vpop.permute.xlu0 %863
      %865 = vrot.lane.b32.xlu0 %v674, 4
      %v866 = vpop.permute.xlu0 %865
      %867 = vrot.lane.b32.xlu0 %v684, 4
      %v868 = vpop.permute.xlu0 %867
      %869 = vrot.lane.b32.xlu0 %v698, 4
      %v870 = vpop.permute.xlu0 %869
      %871 = vrot.lane.b32.xlu0 %v708, 4
      %v872 = vpop.permute.xlu0 %871
      %873 = vrot.lane.b32.xlu0 %v722, 4
      %v874 = vpop.permute.xlu0 %873
      %875 = vrot.lane.b32.xlu0 %v732, 4
      %v876 = vpop.permute.xlu0 %875
      %877 = vrot.lane.b32.xlu0 %v746, 4
      %v878 = vpop.permute.xlu0 %877
      %879 = vrot.lane.b32.xlu0 %v756, 4
      %v880 = vpop.permute.xlu0 %879
      %881 = vrot.lane.b32.xlu0 %v770, 4
      %v882 = vpop.permute.xlu0 %881
      %883 = vrot.lane.b32.xlu0 %v780, 4
      %v884 = vpop.permute.xlu0 %883
      %885 = vrot.lane.b32.xlu0 %v794, 4
      %v886 = vpop.permute.xlu0 %885
      %887 = vrot.lane.b32.xlu0 %v804, 4
      %v888 = vpop.permute.xlu0 %887
      %889 = vrot.lane.b32.xlu0 %v818, 4
      %v890 = vpop.permute.xlu0 %889
      %891 = vrot.lane.b32.xlu0 %v828, 4
      %v892 = vpop.permute.xlu0 %891
      %vm925 = vcmask 60448
      %926 = vst.msk [vmem:[#allocation2] sm:$0xf] %vm925, %v830
      %927 = vst.msk [vmem:[#allocation2 + $0x4] sm:$0xf] %vm925, %v832
      %928 = vst.msk [vmem:[#allocation2 + $0x8] sm:$0xf] %vm925, %v834
      %929 = vst.msk [vmem:[#allocation2 + $0xc] sm:$0xf] %vm925, %v836
      %930 = vst.msk [vmem:[#allocation2 + $0x10] sm:$0xf] %vm925, %v838
      %931 = vst.msk [vmem:[#allocation2 + $0x14] sm:$0xf] %vm925, %v840
      %932 = vst.msk [vmem:[#allocation2 + $0x18] sm:$0xf] %vm925, %v842
      %933 = vst.msk [vmem:[#allocation2 + $0x1c] sm:$0xf] %vm925, %v844
      %934 = vst.msk [vmem:[#allocation2 + $0x20] sm:$0xf] %vm925, %v846
      %935 = vst.msk [vmem:[#allocation2 + $0x24] sm:$0xf] %vm925, %v848
      %936 = vst.msk [vmem:[#allocation2 + $0x28] sm:$0xf] %vm925, %v850
      %937 = vst.msk [vmem:[#allocation2 + $0x2c] sm:$0xf] %vm925, %v852
      %938 = vst.msk [vmem:[#allocation2 + $0x30] sm:$0xf] %vm925, %v854
      %939 = vst.msk [vmem:[#allocation2 + $0x34] sm:$0xf] %vm925, %v856
      %940 = vst.msk [vmem:[#allocation2 + $0x38] sm:$0xf] %vm925, %v858
      %941 = vst.msk [vmem:[#allocation2 + $0x3c] sm:$0xf] %vm925, %v860
      %942 = vst.msk [vmem:[#allocation2 + $0x40] sm:$0xf] %vm925, %v862
      %943 = vst.msk [vmem:[#allocation2 + $0x44] sm:$0xf] %vm925, %v864
      %944 = vst.msk [vmem:[#allocation2 + $0x48] sm:$0xf] %vm925, %v866
      %945 = vst.msk [vmem:[#allocation2 + $0x4c] sm:$0xf] %vm925, %v868
      %946 = vst.msk [vmem:[#allocation2 + $0x50] sm:$0xf] %vm925, %v870
      %947 = vst.msk [vmem:[#allocation2 + $0x54] sm:$0xf] %vm925, %v872
      %948 = vst.msk [vmem:[#allocation2 + $0x58] sm:$0xf] %vm925, %v874
      %949 = vst.msk [vmem:[#allocation2 + $0x5c] sm:$0xf] %vm925, %v876
      %950 = vst.msk [vmem:[#allocation2 + $0x60] sm:$0xf] %vm925, %v878
      %951 = vst.msk [vmem:[#allocation2 + $0x64] sm:$0xf] %vm925, %v880
      %952 = vst.msk [vmem:[#allocation2 + $0x68] sm:$0xf] %vm925, %v882
      %953 = vst.msk [vmem:[#allocation2 + $0x6c] sm:$0xf] %vm925, %v884
      %954 = vst.msk [vmem:[#allocation2 + $0x70] sm:$0xf] %vm925, %v886
      %955 = vst.msk [vmem:[#allocation2 + $0x74] sm:$0xf] %vm925, %v888
      %956 = vst.msk [vmem:[#allocation2 + $0x78] sm:$0xf] %vm925, %v890
      %957 = vst.msk [vmem:[#allocation2 + $0x7c] sm:$0xf] %vm925, %v892
      %v958 = vld [vmem:[%s305] sm:$0xf]
      %v959 = vld [vmem:[%s305 + $0x4] sm:$0xf]
      %v960 = vld [vmem:[%s305 + $0x8] sm:$0x1]
      %v961 = vld [vmem:[%s305 + $0xc] sm:$0xf]
      %v962 = vld [vmem:[%s305 + $0x10] sm:$0xf]
      %v963 = vld [vmem:[%s305 + $0x14] sm:$0x1]
      %v965 = vshrl.u32 %v958, 16
      %v967 = vrot.slane %v965, 4
      %v968 = vshll.u32 %v958, 16
      %v970 = vrot.slane %v968, 5
      %v971 = vor.u32 %v967, %v970
      %v972 = vrot.slane %v971, 4
      %v974 = vshll.u32 %v959, 16
      %v976 = vrot.slane %v974, 5
      %v977 = vsel %vm444, %v972, %v976
      %v978 = vshrl.u32 %v959, 16
      %v980 = vrot.slane %v978, 4
      %v981 = vor.u32 %v980, %v976
      %v982 = vrot.slane %v981, 4
      %v984 = vshll.u32 %v960, 16
      %v986 = vrot.slane %v984, 5
      %v987 = vsel %vm444, %v982, %v986
      %v989 = vshrl.u32 %v961, 16
      %v991 = vrot.slane %v989, 4
      %v992 = vshll.u32 %v961, 16
      %v994 = vrot.slane %v992, 5
      %v995 = vor.u32 %v991, %v994
      %v996 = vrot.slane %v995, 4
      %v998 = vshll.u32 %v962, 16
      %v1000 = vrot.slane %v998, 5
      %v1001 = vsel %vm444, %v996, %v1000
      %v1002 = vshrl.u32 %v962, 16
      %v1004 = vrot.slane %v1002, 4
      %v1005 = vor.u32 %v1004, %v1000
      %v1006 = vrot.slane %v1005, 4
      %v1008 = vshll.u32 %v963, 16
      %v1010 = vrot.slane %v1008, 5
      %v1011 = vsel %vm444, %v1006, %v1010
      %1012 = vrot.lane.b32.xlu0 %v977, 4
      %v1013 = vpop.permute.xlu0 %1012
      %1014 = vrot.lane.b32.xlu0 %v987, 4
      %v1015 = vpop.permute.xlu0 %1014
      %1016 = vrot.lane.b32.xlu0 %v1001, 4
      %v1017 = vpop.permute.xlu0 %1016
      %1018 = vrot.lane.b32.xlu0 %v1011, 4
      %v1019 = vpop.permute.xlu0 %1018
      %1024 = vst.msk [vmem:[#allocation2 + $0x80] sm:$0xf] %vm925, %v1013
      %1025 = vst.msk [vmem:[#allocation2 + $0x84] sm:$0xf] %vm925, %v1015
      %1026 = vst.msk [vmem:[#allocation2 + $0x88] sm:$0xf] %vm925, %v1017
      %1027 = vst.msk [vmem:[#allocation2 + $0x8c] sm:$0xf] %vm925, %v1019
      %v1028 = vld [vmem:[%s287] sm:$0xe]
      %v1029 = vld [vmem:[%s287 + $0x4] sm:$0xf]
      %v1030 = vld [vmem:[%s287 + $0x8] sm:$0x1]
      %v1031 = vld [vmem:[%s287 + $0xc] sm:$0xe]
      %v1032 = vld [vmem:[%s287 + $0x10] sm:$0xf]
      %v1033 = vld [vmem:[%s287 + $0x14] sm:$0x1]
      %v1034 = vld [vmem:[%s287 + $0x18] sm:$0xe]
      %v1035 = vld [vmem:[%s287 + $0x1c] sm:$0xf]
      %v1036 = vld [vmem:[%s287 + $0x20] sm:$0x1]
      %v1037 = vld [vmem:[%s287 + $0x24] sm:$0xe]
      %v1038 = vld [vmem:[%s287 + $0x28] sm:$0xf]
      %v1039 = vld [vmem:[%s287 + $0x2c] sm:$0x1]
      %v1040 = vld [vmem:[%s287 + $0x30] sm:$0xe]
      %v1041 = vld [vmem:[%s287 + $0x34] sm:$0xf]
      %v1042 = vld [vmem:[%s287 + $0x38] sm:$0x1]
      %v1043 = vld [vmem:[%s287 + $0x3c] sm:$0xe]
      %v1044 = vld [vmem:[%s287 + $0x40] sm:$0xf]
      %v1045 = vld [vmem:[%s287 + $0x44] sm:$0x1]
      %v1046 = vld [vmem:[%s287 + $0x48] sm:$0xe]
      %v1047 = vld [vmem:[%s287 + $0x4c] sm:$0xf]
      %v1048 = vld [vmem:[%s287 + $0x50] sm:$0x1]
      %v1049 = vld [vmem:[%s287 + $0x54] sm:$0xe]
      %v1050 = vld [vmem:[%s287 + $0x58] sm:$0xf]
      %v1051 = vld [vmem:[%s287 + $0x5c] sm:$0x1]
      %v1052 = vld [vmem:[%s287 + $0x60] sm:$0xe]
      %v1053 = vld [vmem:[%s287 + $0x64] sm:$0xf]
      %v1054 = vld [vmem:[%s287 + $0x68] sm:$0x1]
      %v1055 = vld [vmem:[%s287 + $0x6c] sm:$0xe]
      %v1056 = vld [vmem:[%s287 + $0x70] sm:$0xf]
      %v1057 = vld [vmem:[%s287 + $0x74] sm:$0x1]
      %v1058 = vld [vmem:[%s287 + $0x78] sm:$0xe]
      %v1059 = vld [vmem:[%s287 + $0x7c] sm:$0xf]
      %v1060 = vld [vmem:[%s287 + $0x80] sm:$0x1]
      %v1061 = vld [vmem:[%s287 + $0x84] sm:$0xe]
      %v1062 = vld [vmem:[%s287 + $0x88] sm:$0xf]
      %v1063 = vld [vmem:[%s287 + $0x8c] sm:$0x1]
      %v1064 = vld [vmem:[%s287 + $0x90] sm:$0xe]
      %v1065 = vld [vmem:[%s287 + $0x94] sm:$0xf]
      %v1066 = vld [vmem:[%s287 + $0x98] sm:$0x1]
      %v1067 = vld [vmem:[%s287 + $0x9c] sm:$0xe]
      %v1068 = vld [vmem:[%s287 + $0xa0] sm:$0xf]
      %v1069 = vld [vmem:[%s287 + $0xa4] sm:$0x1]
      %v1070 = vld [vmem:[%s287 + $0xa8] sm:$0xe]
      %v1071 = vld [vmem:[%s287 + $0xac] sm:$0xf]
      %v1072 = vld [vmem:[%s287 + $0xb0] sm:$0x1]
      %v1073 = vld [vmem:[%s287 + $0xb4] sm:$0xe]
      %v1074 = vld [vmem:[%s287 + $0xb8] sm:$0xf]
      %v1075 = vld [vmem:[%s287 + $0xbc] sm:$0x1]
      %vm1124 = vcmask 1042432
      %vm1125 = vcmask 1046532
      %vm1126 = vmor %vm1124, %vm1125
      %v1127 = vrot.slane %v1028, 5
      %v1128 = vrot.slane %v1127, 4
      %v1129 = vrot.slane %v1029, 5
      %v1130 = vsel %vm1126, %v1128, %v1129
      %v1131 = vrot.slane %v1129, 4
      %v1132 = vrot.slane %v1030, 5
      %v1133 = vsel %vm1126, %v1131, %v1132
      %v1134 = vrot.slane %v1031, 5
      %v1135 = vrot.slane %v1134, 4
      %v1136 = vrot.slane %v1032, 5
      %v1137 = vsel %vm1126, %v1135, %v1136
      %v1138 = vrot.slane %v1136, 4
      %v1139 = vrot.slane %v1033, 5
      %v1140 = vsel %vm1126, %v1138, %v1139
      %v1141 = vrot.slane %v1034, 5
      %v1142 = vrot.slane %v1141, 4
      %v1143 = vrot.slane %v1035, 5
      %v1144 = vsel %vm1126, %v1142, %v1143
      %v1145 = vrot.slane %v1143, 4
      %v1146 = vrot.slane %v1036, 5
      %v1147 = vsel %vm1126, %v1145, %v1146
      %v1148 = vrot.slane %v1037, 5
      %v1149 = vrot.slane %v1148, 4
      %v1150 = vrot.slane %v1038, 5
      %v1151 = vsel %vm1126, %v1149, %v1150
      %v1152 = vrot.slane %v1150, 4
      %v1153 = vrot.slane %v1039, 5
      %v1154 = vsel %vm1126, %v1152, %v1153
      %v1155 = vrot.slane %v1040, 5
      %v1156 = vrot.slane %v1155, 4
      %v1157 = vrot.slane %v1041, 5
      %v1158 = vsel %vm1126, %v1156, %v1157
      %v1159 = vrot.slane %v1157, 4
      %v1160 = vrot.slane %v1042, 5
      %v1161 = vsel %vm1126, %v1159, %v1160
      %v1162 = vrot.slane %v1043, 5
      %v1163 = vrot.slane %v1162, 4
      %v1164 = vrot.slane %v1044, 5
      %v1165 = vsel %vm1126, %v1163, %v1164
      %v1166 = vrot.slane %v1164, 4
      %v1167 = vrot.slane %v1045, 5
      %v1168 = vsel %vm1126, %v1166, %v1167
      %v1169 = vrot.slane %v1046, 5
      %v1170 = vrot.slane %v1169, 4
      %v1171 = vrot.slane %v1047, 5
      %v1172 = vsel %vm1126, %v1170, %v1171
      %v1173 = vrot.slane %v1171, 4
      %v1174 = vrot.slane %v1048, 5
      %v1175 = vsel %vm1126, %v1173, %v1174
      %v1176 = vrot.slane %v1049, 5
      %v1177 = vrot.slane %v1176, 4
      %v1178 = vrot.slane %v1050, 5
      %v1179 = vsel %vm1126, %v1177, %v1178
      %v1180 = vrot.slane %v1178, 4
      %v1181 = vrot.slane %v1051, 5
      %v1182 = vsel %vm1126, %v1180, %v1181
      %v1183 = vrot.slane %v1052, 5
      %v1184 = vrot.slane %v1183, 4
      %v1185 = vrot.slane %v1053, 5
      %v1186 = vsel %vm1126, %v1184, %v1185
      %v1187 = vrot.slane %v1185, 4
      %v1188 = vrot.slane %v1054, 5
      %v1189 = vsel %vm1126, %v1187, %v1188
      %v1190 = vrot.slane %v1055, 5
      %v1191 = vrot.slane %v1190, 4
      %v1192 = vrot.slane %v1056, 5
      %v1193 = vsel %vm1126, %v1191, %v1192
      %v1194 = vrot.slane %v1192, 4
      %v1195 = vrot.slane %v1057, 5
      %v1196 = vsel %vm1126, %v1194, %v1195
      %v1197 = vrot.slane %v1058, 5
      %v1198 = vrot.slane %v1197, 4
      %v1199 = vrot.slane %v1059, 5
      %v1200 = vsel %vm1126, %v1198, %v1199
      %v1201 = vrot.slane %v1199, 4
      %v1202 = vrot.slane %v1060, 5
      %v1203 = vsel %vm1126, %v1201, %v1202
      %v1204 = vrot.slane %v1061, 5
      %v1205 = vrot.slane %v1204, 4
      %v1206 = vrot.slane %v1062, 5
      %v1207 = vsel %vm1126, %v1205, %v1206
      %v1208 = vrot.slane %v1206, 4
      %v1209 = vrot.slane %v1063, 5
      %v1210 = vsel %vm1126, %v1208, %v1209
      %v1211 = vrot.slane %v1064, 5
      %v1212 = vrot.slane %v1211, 4
      %v1213 = vrot.slane %v1065, 5
      %v1214 = vsel %vm1126, %v1212, %v1213
      %v1215 = vrot.slane %v1213, 4
      %v1216 = vrot.slane %v1066, 5
      %v1217 = vsel %vm1126, %v1215, %v1216
      %v1218 = vrot.slane %v1067, 5
      %v1219 = vrot.slane %v1218, 4
      %v1220 = vrot.slane %v1068, 5
      %v1221 = vsel %vm1126, %v1219, %v1220
      %v1222 = vrot.slane %v1220, 4
      %v1223 = vrot.slane %v1069, 5
      %v1224 = vsel %vm1126, %v1222, %v1223
      %v1225 = vrot.slane %v1070, 5
      %v1226 = vrot.slane %v1225, 4
      %v1227 = vrot.slane %v1071, 5
      %v1228 = vsel %vm1126, %v1226, %v1227
      %v1229 = vrot.slane %v1227, 4
      %v1230 = vrot.slane %v1072, 5
      %v1231 = vsel %vm1126, %v1229, %v1230
      %v1232 = vrot.slane %v1073, 5
      %v1233 = vrot.slane %v1232, 4
      %v1234 = vrot.slane %v1074, 5
      %v1235 = vsel %vm1126, %v1233, %v1234
      %v1236 = vrot.slane %v1234, 4
      %v1237 = vrot.slane %v1075, 5
      %v1238 = vsel %vm1126, %v1236, %v1237
      %1239 = vrot.lane.b32.xlu0 %v1130, 8
      %v1240 = vpop.permute.xlu0 %1239
      %1241 = vrot.lane.b32.xlu0 %v1133, 8
      %v1242 = vpop.permute.xlu0 %1241
      %1243 = vrot.lane.b32.xlu0 %v1137, 8
      %v1244 = vpop.permute.xlu0 %1243
      %1245 = vrot.lane.b32.xlu0 %v1140, 8
      %v1246 = vpop.permute.xlu0 %1245
      %1247 = vrot.lane.b32.xlu0 %v1144, 8
      %v1248 = vpop.permute.xlu0 %1247
      %1249 = vrot.lane.b32.xlu0 %v1147, 8
      %v1250 = vpop.permute.xlu0 %1249
      %1251 = vrot.lane.b32.xlu0 %v1151, 8
      %v1252 = vpop.permute.xlu0 %1251
      %1253 = vrot.lane.b32.xlu0 %v1154, 8
      %v1254 = vpop.permute.xlu0 %1253
      %1255 = vrot.lane.b32.xlu0 %v1158, 8
      %v1256 = vpop.permute.xlu0 %1255
      %1257 = vrot.lane.b32.xlu0 %v1161, 8
      %v1258 = vpop.permute.xlu0 %1257
      %1259 = vrot.lane.b32.xlu0 %v1165, 8
      %v1260 = vpop.permute.xlu0 %1259
      %1261 = vrot.lane.b32.xlu0 %v1168, 8
      %v1262 = vpop.permute.xlu0 %1261
      %1263 = vrot.lane.b32.xlu0 %v1172, 8
      %v1264 = vpop.permute.xlu0 %1263
      %1265 = vrot.lane.b32.xlu0 %v1175, 8
      %v1266 = vpop.permute.xlu0 %1265
      %1267 = vrot.lane.b32.xlu0 %v1179, 8
      %v1268 = vpop.permute.xlu0 %1267
      %1269 = vrot.lane.b32.xlu0 %v1182, 8
      %v1270 = vpop.permute.xlu0 %1269
      %1271 = vrot.lane.b32.xlu0 %v1186, 8
      %v1272 = vpop.permute.xlu0 %1271
      %1273 = vrot.lane.b32.xlu0 %v1189, 8
      %v1274 = vpop.permute.xlu0 %1273
      %1275 = vrot.lane.b32.xlu0 %v1193, 8
      %v1276 = vpop.permute.xlu0 %1275
      %1277 = vrot.lane.b32.xlu0 %v1196, 8
      %v1278 = vpop.permute.xlu0 %1277
      %1279 = vrot.lane.b32.xlu0 %v1200, 8
      %v1280 = vpop.permute.xlu0 %1279
      %1281 = vrot.lane.b32.xlu0 %v1203, 8
      %v1282 = vpop.permute.xlu0 %1281
      %1283 = vrot.lane.b32.xlu0 %v1207, 8
      %v1284 = vpop.permute.xlu0 %1283
      %1285 = vrot.lane.b32.xlu0 %v1210, 8
      %v1286 = vpop.permute.xlu0 %1285
      %1287 = vrot.lane.b32.xlu0 %v1214, 8
      %v1288 = vpop.permute.xlu0 %1287
      %1289 = vrot.lane.b32.xlu0 %v1217, 8
      %v1290 = vpop.permute.xlu0 %1289
      %1291 = vrot.lane.b32.xlu0 %v1221, 8
      %v1292 = vpop.permute.xlu0 %1291
      %1293 = vrot.lane.b32.xlu0 %v1224, 8
      %v1294 = vpop.permute.xlu0 %1293
      %1295 = vrot.lane.b32.xlu0 %v1228, 8
      %v1296 = vpop.permute.xlu0 %1295
      %1297 = vrot.lane.b32.xlu0 %v1231, 8
      %v1298 = vpop.permute.xlu0 %1297
      %1299 = vrot.lane.b32.xlu0 %v1235, 8
      %v1300 = vpop.permute.xlu0 %1299
      %1301 = vrot.lane.b32.xlu0 %v1238, 8
      %v1302 = vpop.permute.xlu0 %1301
      %vm1335 = vcmask 93248
      %1336 = vst.msk [vmem:[#allocation2] sm:$0xf] %vm1335, %v1240
      %1337 = vst.msk [vmem:[#allocation2 + $0x4] sm:$0xf] %vm1335, %v1242
      %1338 = vst.msk [vmem:[#allocation2 + $0x8] sm:$0xf] %vm1335, %v1244
      %1339 = vst.msk [vmem:[#allocation2 + $0xc] sm:$0xf] %vm1335, %v1246
      %1340 = vst.msk [vmem:[#allocation2 + $0x10] sm:$0xf] %vm1335, %v1248
      %1341 = vst.msk [vmem:[#allocation2 + $0x14] sm:$0xf] %vm1335, %v1250
      %1342 = vst.msk [vmem:[#allocation2 + $0x18] sm:$0xf] %vm1335, %v1252
      %1343 = vst.msk [vmem:[#allocation2 + $0x1c] sm:$0xf] %vm1335, %v1254
      %1344 = vst.msk [vmem:[#allocation2 + $0x20] sm:$0xf] %vm1335, %v1256
      %1345 = vst.msk [vmem:[#allocation2 + $0x24] sm:$0xf] %vm1335, %v1258
      %1346 = vst.msk [vmem:[#allocation2 + $0x28] sm:$0xf] %vm1335, %v1260
      %1347 = vst.msk [vmem:[#allocation2 + $0x2c] sm:$0xf] %vm1335, %v1262
      %1348 = vst.msk [vmem:[#allocation2 + $0x30] sm:$0xf] %vm1335, %v1264
      %1349 = vst.msk [vmem:[#allocation2 + $0x34] sm:$0xf] %vm1335, %v1266
      %1350 = vst.msk [vmem:[#allocation2 + $0x38] sm:$0xf] %vm1335, %v1268
      %1351 = vst.msk [vmem:[#allocation2 + $0x3c] sm:$0xf] %vm1335, %v1270
      %1352 = vst.msk [vmem:[#allocation2 + $0x40] sm:$0xf] %vm1335, %v1272
      %1353 = vst.msk [vmem:[#allocation2 + $0x44] sm:$0xf] %vm1335, %v1274
      %1354 = vst.msk [vmem:[#allocation2 + $0x48] sm:$0xf] %vm1335, %v1276
      %1355 = vst.msk [vmem:[#allocation2 + $0x4c] sm:$0xf] %vm1335, %v1278
      %1356 = vst.msk [vmem:[#allocation2 + $0x50] sm:$0xf] %vm1335, %v1280
      %1357 = vst.msk [vmem:[#allocation2 + $0x54] sm:$0xf] %vm1335, %v1282
      %1358 = vst.msk [vmem:[#allocation2 + $0x58] sm:$0xf] %vm1335, %v1284
      %1359 = vst.msk [vmem:[#allocation2 + $0x5c] sm:$0xf] %vm1335, %v1286
      %1360 = vst.msk [vmem:[#allocation2 + $0x60] sm:$0xf] %vm1335, %v1288
      %1361 = vst.msk [vmem:[#allocation2 + $0x64] sm:$0xf] %vm1335, %v1290
      %1362 = vst.msk [vmem:[#allocation2 + $0x68] sm:$0xf] %vm1335, %v1292
      %1363 = vst.msk [vmem:[#allocation2 + $0x6c] sm:$0xf] %vm1335, %v1294
      %1364 = vst.msk [vmem:[#allocation2 + $0x70] sm:$0xf] %vm1335, %v1296
      %1365 = vst.msk [vmem:[#allocation2 + $0x74] sm:$0xf] %vm1335, %v1298
      %1366 = vst.msk [vmem:[#allocation2 + $0x78] sm:$0xf] %vm1335, %v1300
      %1367 = vst.msk [vmem:[#allocation2 + $0x7c] sm:$0xf] %vm1335, %v1302
      %v1368 = vld [vmem:[%s305] sm:$0xe]
      %v1369 = vld [vmem:[%s305 + $0x4] sm:$0xf]
      %v1370 = vld [vmem:[%s305 + $0x8] sm:$0x1]
      %v1371 = vld [vmem:[%s305 + $0xc] sm:$0xe]
      %v1372 = vld [vmem:[%s305 + $0x10] sm:$0xf]
      %v1373 = vld [vmem:[%s305 + $0x14] sm:$0x1]
      %v1380 = vrot.slane %v1368, 5
      %v1381 = vrot.slane %v1380, 4
      %v1382 = vrot.slane %v1369, 5
      %v1383 = vsel %vm1126, %v1381, %v1382
      %v1384 = vrot.slane %v1382, 4
      %v1385 = vrot.slane %v1370, 5
      %v1386 = vsel %vm1126, %v1384, %v1385
      %v1387 = vrot.slane %v1371, 5
      %v1388 = vrot.slane %v1387, 4
      %v1389 = vrot.slane %v1372, 5
      %v1390 = vsel %vm1126, %v1388, %v1389
      %v1391 = vrot.slane %v1389, 4
      %v1392 = vrot.slane %v1373, 5
      %v1393 = vsel %vm1126, %v1391, %v1392
      %1394 = vrot.lane.b32.xlu0 %v1383, 8
      %v1395 = vpop.permute.xlu0 %1394
      %1396 = vrot.lane.b32.xlu0 %v1386, 8
      %v1397 = vpop.permute.xlu0 %1396
      %1398 = vrot.lane.b32.xlu0 %v1390, 8
      %v1399 = vpop.permute.xlu0 %1398
      %1400 = vrot.lane.b32.xlu0 %v1393, 8
      %v1401 = vpop.permute.xlu0 %1400
      %1406 = vst.msk [vmem:[#allocation2 + $0x80] sm:$0xf] %vm1335, %v1395
      %1407 = vst.msk [vmem:[#allocation2 + $0x84] sm:$0xf] %vm1335, %v1397
      %1408 = vst.msk [vmem:[#allocation2 + $0x88] sm:$0xf] %vm1335, %v1399
      %1409 = vst.msk [vmem:[#allocation2 + $0x8c] sm:$0xf] %vm1335, %v1401
      %v1410 = vld [vmem:[%s3] sm:$0x1]
      %v1411 = vld [vmem:[#allocation2] sm:$0xf]
      %v1412 = vld [vmem:[#allocation2 + $0x4] sm:$0xf]
      %v1413 = vld [vmem:[#allocation2 + $0x8] sm:$0xf]
      %v1414 = vld [vmem:[#allocation2 + $0xc] sm:$0xf]
      %v1415 = vld [vmem:[#allocation2 + $0x10] sm:$0xf]
      %v1416 = vld [vmem:[#allocation2 + $0x14] sm:$0xf]
      %v1417 = vld [vmem:[#allocation2 + $0x18] sm:$0xf]
      %v1418 = vld [vmem:[#allocation2 + $0x1c] sm:$0xf]
      %v1419 = vld [vmem:[#allocation2 + $0x20] sm:$0xf]
      %v1420 = vld [vmem:[#allocation2 + $0x24] sm:$0xf]
      %v1421 = vld [vmem:[#allocation2 + $0x28] sm:$0xf]
      %v1422 = vld [vmem:[#allocation2 + $0x2c] sm:$0xf]
      %v1423 = vld [vmem:[#allocation2 + $0x30] sm:$0xf]
      %v1424 = vld [vmem:[#allocation2 + $0x34] sm:$0xf]
      %v1425 = vld [vmem:[#allocation2 + $0x38] sm:$0xf]
      %v1426 = vld [vmem:[#allocation2 + $0x3c] sm:$0xf]
      %v1427 = vld [vmem:[#allocation2 + $0x40] sm:$0xf]
      %v1428 = vld [vmem:[#allocation2 + $0x44] sm:$0xf]
      %v1429 = vld [vmem:[#allocation2 + $0x48] sm:$0xf]
      %v1430 = vld [vmem:[#allocation2 + $0x4c] sm:$0xf]
      %v1431 = vld [vmem:[#allocation2 + $0x50] sm:$0xf]
      %v1432 = vld [vmem:[#allocation2 + $0x54] sm:$0xf]
      %v1433 = vld [vmem:[#allocation2 + $0x58] sm:$0xf]
      %v1434 = vld [vmem:[#allocation2 + $0x5c] sm:$0xf]
      %v1435 = vld [vmem:[#allocation2 + $0x60] sm:$0xf]
      %v1436 = vld [vmem:[#allocation2 + $0x64] sm:$0xf]
      %v1437 = vld [vmem:[#allocation2 + $0x68] sm:$0xf]
      %v1438 = vld [vmem:[#allocation2 + $0x6c] sm:$0xf]
      %v1439 = vld [vmem:[#allocation2 + $0x70] sm:$0xf]
      %v1440 = vld [vmem:[#allocation2 + $0x74] sm:$0xf]
      %v1441 = vld [vmem:[#allocation2 + $0x78] sm:$0xf]
      %v1442 = vld [vmem:[#allocation2 + $0x7c] sm:$0xf]
      %v1443 = vld [vmem:[#allocation2 + $0x80] sm:$0xf]
      %v1444 = vld [vmem:[#allocation2 + $0x84] sm:$0xf]
      %v1445 = vld [vmem:[%s2] sm:$0xf]
      %v1446 = vld [vmem:[%s2 + $0x4] sm:$0x3]
      %s1447 = scalar_lea.vmem %s2, 8
      %v1448 = vld [vmem:[%s1447] sm:$0xf]
      %v1449 = vld [vmem:[%s1447 + $0x4] sm:$0x3]
      %v1482 = vunpack.c.l.b16 %v1413
      %v1483 = vunpack.c.l.b16 %v1414
      %v1484 = vunpack.c.l.b16 %v1415
      %v1485 = vunpack.c.l.b16 %v1416
      %v1486 = vunpack.c.l.b16 %v1417
      %v1487 = vunpack.c.l.b16 %v1418
      %v1488 = vunpack.c.l.b16 %v1419
      %v1489 = vunpack.c.l.b16 %v1420
      %v1490 = vunpack.c.l.b16 %v1421
      %v1491 = vunpack.c.l.b16 %v1422
      %v1492 = vunpack.c.l.b16 %v1423
      %v1493 = vunpack.c.l.b16 %v1424
      %v1494 = vunpack.c.l.b16 %v1425
      %v1495 = vunpack.c.l.b16 %v1426
      %v1496 = vunpack.c.l.b16 %v1427
      %v1497 = vunpack.c.l.b16 %v1428
      %v1498 = vunpack.c.l.b16 %v1429
      %v1499 = vunpack.c.l.b16 %v1430
      %v1500 = vunpack.c.l.b16 %v1431
      %v1501 = vunpack.c.l.b16 %v1432
      %v1502 = vunpack.c.l.b16 %v1433
      %v1503 = vunpack.c.l.b16 %v1434
      %v1504 = vunpack.c.l.b16 %v1435
      %v1505 = vunpack.c.l.b16 %v1436
      %v1506 = vunpack.c.l.b16 %v1437
      %v1507 = vunpack.c.l.b16 %v1438
      %v1508 = vunpack.c.l.b16 %v1439
      %v1509 = vunpack.c.l.b16 %v1440
      %v1510 = vunpack.c.l.b16 %v1441
      %v1511 = vunpack.c.l.b16 %v1442
      %v1512 = vunpack.c.l.b16 %v1443
      %v1513 = vunpack.c.l.b16 %v1444
      %v1514 = vpack.c.b16 %v1483, %v1482
      %v1515 = vpack.c.b16 %v1485, %v1484
      %v1516 = vpack.c.b16 %v1487, %v1486
      %v1517 = vpack.c.b16 %v1489, %v1488
      %v1518 = vpack.c.b16 %v1491, %v1490
      %v1519 = vpack.c.b16 %v1493, %v1492
      %v1520 = vpack.c.b16 %v1495, %v1494
      %v1521 = vpack.c.b16 %v1497, %v1496
      %v1522 = vpack.c.b16 %v1499, %v1498
      %v1523 = vpack.c.b16 %v1501, %v1500
      %v1524 = vpack.c.b16 %v1503, %v1502
      %v1525 = vpack.c.b16 %v1505, %v1504
      %v1526 = vpack.c.b16 %v1507, %v1506
      %v1527 = vpack.c.b16 %v1509, %v1508
      %v1528 = vpack.c.b16 %v1511, %v1510
      %v1529 = vpack.c.b16 %v1513, %v1512
      %v1532 = vunpack.c.l.b16 %v1448
      %v1533 = vunpack.c.l.b16 %v1449
      %v1534 = vpack.c.b16 %v1533, %v1532
      %vm1535 = vcmask 97280
      %v1537 = vsel %vm1535, %v1514, 0
      %v1540 = vsel %vm1535, %v1515, 0
      %v1543 = vsel %vm1535, %v1516, 0
      %v1546 = vsel %vm1535, %v1517, 0
      %v1549 = vsel %vm1535, %v1518, 0
      %v1552 = vsel %vm1535, %v1519, 0
      %v1555 = vsel %vm1535, %v1520, 0
      %v1558 = vsel %vm1535, %v1521, 0
      %v1561 = vsel %vm1535, %v1522, 0
      %v1564 = vsel %vm1535, %v1523, 0
      %v1567 = vsel %vm1535, %v1524, 0
      %v1570 = vsel %vm1535, %v1525, 0
      %v1573 = vsel %vm1535, %v1526, 0
      %v1576 = vsel %vm1535, %v1527, 0
      %v1579 = vsel %vm1535, %v1528, 0
      %v1582 = vsel %vm1535, %v1529, 0
      %vm1584 = vcmask 1045504
      %v1586 = vsel %vm1584, %v1534, 0
      %1588 = vmatprep.subr.bf16.mxu0 0
      %1589 = vmatpush1.bf16.msra.mxu0 0
      %1590 = vmatprep.subr.bf16.mxu0 0
      %1591 = vmatpush1.bf16.msra.mxu0 0
      %1592 = vmatprep.subr.bf16.mxu0 0
      %1593 = vmatpush1.bf16.msra.mxu0 0
      %1594 = vmatprep.subr.bf16.mxu0 0
      %1595 = vmatpush1.bf16.msra.mxu0 0
      %1596 = vmatprep.subr.bf16.mxu0 0
      %1597 = vmatpush1.bf16.msra.mxu0 0
      %1598 = vmatprep.subr.bf16.mxu0 0
      %1599 = vmatpush1.bf16.msra.mxu0 0
      %1600 = vmatprep.subr.bf16.mxu0 0
      %1601 = vmatpush1.bf16.msra.mxu0 0
      %1602 = vmatprep.subr.bf16.mxu0 0
      %1603 = vmatpush1.bf16.msra.mxu0 %v1586
      %1604 = vmatprep.subr.bf16.mxu0 0
      %1605 = vmatpush2.bf16.msra.mxu0 0
      %1606 = vmatprep.subr.bf16.mxu0 0
      %1607 = vmatpush2.bf16.msra.mxu0 0
      %1608 = vmatprep.subr.bf16.mxu0 0
      %1609 = vmatpush2.bf16.msra.mxu0 0
      %1610 = vmatprep.subr.bf16.mxu0 0
      %1611 = vmatpush2.bf16.msra.mxu0 0
      %1612 = vmatprep.subr.bf16.mxu0 0
      %1613 = vmatpush2.bf16.msra.mxu0 0
      %1614 = vmatprep.subr.bf16.mxu0 0
      %1615 = vmatpush2.bf16.msra.mxu0 0
      %1616 = vmatprep.subr.bf16.mxu0 0
      %1617 = vmatpush2.bf16.msra.mxu0 0
      %1618 = vmatprep.subr.bf16.mxu0 0
      %1619 = vmatpush2.bf16.msra.mxu0 0
      %1620 = vmatprep.mubr.bf16.mxu0 0
      %1621 = vmatmul.mubr.bf16.gmra.mxu0 %v1537
      %v1622 = vpop.f32.mrf.mxu0
      %v1623 = vadd.f32 0.0, %v1622
      %v1624 = vpop.f32.mrf.mxu0
      %v1625 = vpop.f32.mrf.mxu0
      %v1626 = vadd.f32 0.0, %v1625
      %v1627 = vpop.f32.mrf.mxu0
      %1628 = vmatprep.mubr.bf16.mxu0 0
      %1629 = vmatmul.mubr.bf16.gmra.mxu0 %v1540
      %v1630 = vpop.f32.mrf.mxu0
      %v1631 = vadd.f32 0.0, %v1630
      %v1632 = vpop.f32.mrf.mxu0
      %v1633 = vpop.f32.mrf.mxu0
      %v1634 = vadd.f32 0.0, %v1633
      %v1635 = vpop.f32.mrf.mxu0
      %1636 = vmatprep.mubr.bf16.mxu0 0
      %1637 = vmatmul.mubr.bf16.gmra.mxu0 %v1543
      %v1638 = vpop.f32.mrf.mxu0
      %v1639 = vadd.f32 0.0, %v1638
      %v1640 = vpop.f32.mrf.mxu0
      %v1641 = vpop.f32.mrf.mxu0
      %v1642 = vadd.f32 0.0, %v1641
      %v1643 = vpop.f32.mrf.mxu0
      %1644 = vmatprep.mubr.bf16.mxu0 0
      %1645 = vmatmul.mubr.bf16.gmra.mxu0 %v1546
      %v1646 = vpop.f32.mrf.mxu0
      %v1647 = vadd.f32 0.0, %v1646
      %v1648 = vpop.f32.mrf.mxu0
      %v1649 = vpop.f32.mrf.mxu0
      %v1650 = vadd.f32 0.0, %v1649
      %v1651 = vpop.f32.mrf.mxu0
      %1652 = vmatprep.mubr.bf16.mxu0 0
      %1653 = vmatmul.mubr.bf16.gmra.mxu0 %v1549
      %v1654 = vpop.f32.mrf.mxu0
      %v1655 = vadd.f32 0.0, %v1654
      %v1656 = vpop.f32.mrf.mxu0
      %v1657 = vpop.f32.mrf.mxu0
      %v1658 = vadd.f32 0.0, %v1657
      %v1659 = vpop.f32.mrf.mxu0
      %1660 = vmatprep.mubr.bf16.mxu0 0
      %1661 = vmatmul.mubr.bf16.gmra.mxu0 %v1552
      %v1662 = vpop.f32.mrf.mxu0
      %v1663 = vadd.f32 0.0, %v1662
      %v1664 = vpop.f32.mrf.mxu0
      %v1665 = vpop.f32.mrf.mxu0
      %v1666 = vadd.f32 0.0, %v1665
      %v1667 = vpop.f32.mrf.mxu0
      %1668 = vmatprep.mubr.bf16.mxu0 0
      %1669 = vmatmul.mubr.bf16.gmra.mxu0 %v1555
      %v1670 = vpop.f32.mrf.mxu0
      %v1671 = vadd.f32 0.0, %v1670
      %v1672 = vpop.f32.mrf.mxu0
      %v1673 = vpop.f32.mrf.mxu0
      %v1674 = vadd.f32 0.0, %v1673
      %v1675 = vpop.f32.mrf.mxu0
      %1676 = vmatprep.mubr.bf16.mxu0 0
      %1677 = vmatmul.mubr.bf16.gmra.mxu0 %v1558
      %v1678 = vpop.f32.mrf.mxu0
      %v1679 = vadd.f32 0.0, %v1678
      %v1680 = vpop.f32.mrf.mxu0
      %v1681 = vpop.f32.mrf.mxu0
      %v1682 = vadd.f32 0.0, %v1681
      %v1683 = vpop.f32.mrf.mxu0
      %1684 = vmatprep.mubr.bf16.mxu0 0
      %1685 = vmatmul.mubr.bf16.gmra.mxu0 %v1561
      %v1686 = vpop.f32.mrf.mxu0
      %v1687 = vadd.f32 0.0, %v1686
      %v1688 = vpop.f32.mrf.mxu0
      %v1689 = vpop.f32.mrf.mxu0
      %v1690 = vadd.f32 0.0, %v1689
      %v1691 = vpop.f32.mrf.mxu0
      %1692 = vmatprep.mubr.bf16.mxu0 0
      %1693 = vmatmul.mubr.bf16.gmra.mxu0 %v1564
      %v1694 = vpop.f32.mrf.mxu0
      %v1695 = vadd.f32 0.0, %v1694
      %v1696 = vpop.f32.mrf.mxu0
      %v1697 = vpop.f32.mrf.mxu0
      %v1698 = vadd.f32 0.0, %v1697
      %v1699 = vpop.f32.mrf.mxu0
      %1700 = vmatprep.mubr.bf16.mxu0 0
      %1701 = vmatmul.mubr.bf16.gmra.mxu0 %v1567
      %v1702 = vpop.f32.mrf.mxu0
      %v1703 = vadd.f32 0.0, %v1702
      %v1704 = vpop.f32.mrf.mxu0
      %v1705 = vpop.f32.mrf.mxu0
      %v1706 = vadd.f32 0.0, %v1705
      %v1707 = vpop.f32.mrf.mxu0
      %1708 = vmatprep.mubr.bf16.mxu0 0
      %1709 = vmatmul.mubr.bf16.gmra.mxu0 %v1570
      %v1710 = vpop.f32.mrf.mxu0
      %v1711 = vadd.f32 0.0, %v1710
      %v1712 = vpop.f32.mrf.mxu0
      %v1713 = vpop.f32.mrf.mxu0
      %v1714 = vadd.f32 0.0, %v1713
      %v1715 = vpop.f32.mrf.mxu0
      %1716 = vmatprep.mubr.bf16.mxu0 0
      %1717 = vmatmul.mubr.bf16.gmra.mxu0 %v1573
      %v1718 = vpop.f32.mrf.mxu0
      %v1719 = vadd.f32 0.0, %v1718
      %v1720 = vpop.f32.mrf.mxu0
      %v1721 = vpop.f32.mrf.mxu0
      %v1722 = vadd.f32 0.0, %v1721
      %v1723 = vpop.f32.mrf.mxu0
      %1724 = vmatprep.mubr.bf16.mxu0 0
      %1725 = vmatmul.mubr.bf16.gmra.mxu0 %v1576
      %v1726 = vpop.f32.mrf.mxu0
      %v1727 = vadd.f32 0.0, %v1726
      %v1728 = vpop.f32.mrf.mxu0
      %v1729 = vpop.f32.mrf.mxu0
      %v1730 = vadd.f32 0.0, %v1729
      %v1731 = vpop.f32.mrf.mxu0
      %1732 = vmatprep.mubr.bf16.mxu0 0
      %1733 = vmatmul.mubr.bf16.gmra.mxu0 %v1579
      %v1734 = vpop.f32.mrf.mxu0
      %v1735 = vadd.f32 0.0, %v1734
      %v1736 = vpop.f32.mrf.mxu0
      %v1737 = vpop.f32.mrf.mxu0
      %v1738 = vadd.f32 0.0, %v1737
      %v1739 = vpop.f32.mrf.mxu0
      %1740 = vmatprep.mubr.bf16.mxu0 0
      %1741 = vmatmul.mubr.bf16.gmra.mxu0 %v1582
      %v1742 = vpop.f32.mrf.mxu0
      %v1743 = vadd.f32 0.0, %v1742
      %v1744 = vpop.f32.mrf.mxu0
      %v1745 = vpop.f32.mrf.mxu0
      %v1746 = vadd.f32 0.0, %v1745
      %v1747 = vpop.f32.mrf.mxu0
      %1748 = vdwg.mxu0
      %v1751 = vunpack.c.l.b16 %v1411
      %v1752 = vunpack.c.l.b16 %v1412
      %v1753 = vpack.c.b16 %v1752, %v1751
      %v1756 = vunpack.c.l.b16 %v1445
      %v1757 = vunpack.c.l.b16 %v1446
      %v1758 = vpack.c.b16 %v1757, %v1756
      %v1760 = vsel %vm1535, %v1753, 0
      %v1763 = vsel %vm1584, %v1758, 0
      %1765 = vmatprep.subr.bf16.mxu0 0
      %1766 = vmatpush1.bf16.msra.mxu0 0
      %1767 = vmatprep.subr.bf16.mxu0 0
      %1768 = vmatpush1.bf16.msra.mxu0 0
      %1769 = vmatprep.subr.bf16.mxu0 0
      %1770 = vmatpush1.bf16.msra.mxu0 0
      %1771 = vmatprep.subr.bf16.mxu0 0
      %1772 = vmatpush1.bf16.msra.mxu0 0
      %1773 = vmatprep.subr.bf16.mxu0 0
      %1774 = vmatpush1.bf16.msra.mxu0 0
      %1775 = vmatprep.subr.bf16.mxu0 0
      %1776 = vmatpush1.bf16.msra.mxu0 0
      %1777 = vmatprep.subr.bf16.mxu0 0
      %1778 = vmatpush1.bf16.msra.mxu0 0
      %1779 = vmatprep.subr.bf16.mxu0 0
      %1780 = vmatpush1.bf16.msra.mxu0 %v1763
      %1781 = vmatprep.subr.bf16.mxu0 0
      %1782 = vmatpush2.bf16.msra.mxu0 0
      %1783 = vmatprep.subr.bf16.mxu0 0
      %1784 = vmatpush2.bf16.msra.mxu0 0
      %1785 = vmatprep.subr.bf16.mxu0 0
      %1786 = vmatpush2.bf16.msra.mxu0 0
      %1787 = vmatprep.subr.bf16.mxu0 0
      %1788 = vmatpush2.bf16.msra.mxu0 0
      %1789 = vmatprep.subr.bf16.mxu0 0
      %1790 = vmatpush2.bf16.msra.mxu0 0
      %1791 = vmatprep.subr.bf16.mxu0 0
      %1792 = vmatpush2.bf16.msra.mxu0 0
      %1793 = vmatprep.subr.bf16.mxu0 0
      %1794 = vmatpush2.bf16.msra.mxu0 0
      %1795 = vmatprep.subr.bf16.mxu0 0
      %1796 = vmatpush2.bf16.msra.mxu0 0
      %1797 = vmatprep.mubr.bf16.mxu0 0
      %1798 = vmatmul.mubr.bf16.gmra.mxu0 %v1760
      %v1799 = vpop.f32.mrf.mxu0
      %v1800 = vadd.f32 %v1623, %v1799
      %v1801 = vpop.f32.mrf.mxu0
      %v1802 = vpop.f32.mrf.mxu0
      %v1803 = vadd.f32 %v1626, %v1802
      %v1804 = vpop.f32.mrf.mxu0
      %1805 = vmatprep.mubr.bf16.mxu0 0
      %1806 = vmatmul.mubr.bf16.gmra.mxu0 %v1537
      %v1807 = vpop.f32.mrf.mxu0
      %v1808 = vadd.f32 %v1631, %v1807
      %v1809 = vpop.f32.mrf.mxu0
      %v1810 = vpop.f32.mrf.mxu0
      %v1811 = vadd.f32 %v1634, %v1810
      %v1812 = vpop.f32.mrf.mxu0
      %1813 = vmatprep.mubr.bf16.mxu0 0
      %1814 = vmatmul.mubr.bf16.gmra.mxu0 %v1540
      %v1815 = vpop.f32.mrf.mxu0
      %v1816 = vadd.f32 %v1639, %v1815
      %v1817 = vpop.f32.mrf.mxu0
      %v1818 = vpop.f32.mrf.mxu0
      %v1819 = vadd.f32 %v1642, %v1818
      %v1820 = vpop.f32.mrf.mxu0
      %1821 = vmatprep.mubr.bf16.mxu0 0
      %1822 = vmatmul.mubr.bf16.gmra.mxu0 %v1543
      %v1823 = vpop.f32.mrf.mxu0
      %v1824 = vadd.f32 %v1647, %v1823
      %v1825 = vpop.f32.mrf.mxu0
      %v1826 = vpop.f32.mrf.mxu0
      %v1827 = vadd.f32 %v1650, %v1826
      %v1828 = vpop.f32.mrf.mxu0
      %1829 = vmatprep.mubr.bf16.mxu0 0
      %1830 = vmatmul.mubr.bf16.gmra.mxu0 %v1546
      %v1831 = vpop.f32.mrf.mxu0
      %v1832 = vadd.f32 %v1655, %v1831
      %v1833 = vpop.f32.mrf.mxu0
      %v1834 = vpop.f32.mrf.mxu0
      %v1835 = vadd.f32 %v1658, %v1834
      %v1836 = vpop.f32.mrf.mxu0
      %1837 = vmatprep.mubr.bf16.mxu0 0
      %1838 = vmatmul.mubr.bf16.gmra.mxu0 %v1549
      %v1839 = vpop.f32.mrf.mxu0
      %v1840 = vadd.f32 %v1663, %v1839
      %v1841 = vpop.f32.mrf.mxu0
      %v1842 = vpop.f32.mrf.mxu0
      %v1843 = vadd.f32 %v1666, %v1842
      %v1844 = vpop.f32.mrf.mxu0
      %1845 = vmatprep.mubr.bf16.mxu0 0
      %1846 = vmatmul.mubr.bf16.gmra.mxu0 %v1552
      %v1847 = vpop.f32.mrf.mxu0
      %v1848 = vadd.f32 %v1671, %v1847
      %v1849 = vpop.f32.mrf.mxu0
      %v1850 = vpop.f32.mrf.mxu0
      %v1851 = vadd.f32 %v1674, %v1850
      %v1852 = vpop.f32.mrf.mxu0
      %1853 = vmatprep.mubr.bf16.mxu0 0
      %1854 = vmatmul.mubr.bf16.gmra.mxu0 %v1555
      %v1855 = vpop.f32.mrf.mxu0
      %v1856 = vadd.f32 %v1679, %v1855
      %v1857 = vpop.f32.mrf.mxu0
      %v1858 = vpop.f32.mrf.mxu0
      %v1859 = vadd.f32 %v1682, %v1858
      %v1860 = vpop.f32.mrf.mxu0
      %1861 = vmatprep.mubr.bf16.mxu0 0
      %1862 = vmatmul.mubr.bf16.gmra.mxu0 %v1558
      %v1863 = vpop.f32.mrf.mxu0
      %v1864 = vadd.f32 %v1687, %v1863
      %v1865 = vpop.f32.mrf.mxu0
      %v1866 = vpop.f32.mrf.mxu0
      %v1867 = vadd.f32 %v1690, %v1866
      %v1868 = vpop.f32.mrf.mxu0
      %1869 = vmatprep.mubr.bf16.mxu0 0
      %1870 = vmatmul.mubr.bf16.gmra.mxu0 %v1561
      %v1871 = vpop.f32.mrf.mxu0
      %v1872 = vadd.f32 %v1695, %v1871
      %v1873 = vpop.f32.mrf.mxu0
      %v1874 = vpop.f32.mrf.mxu0
      %v1875 = vadd.f32 %v1698, %v1874
      %v1876 = vpop.f32.mrf.mxu0
      %1877 = vmatprep.mubr.bf16.mxu0 0
      %1878 = vmatmul.mubr.bf16.gmra.mxu0 %v1564
      %v1879 = vpop.f32.mrf.mxu0
      %v1880 = vadd.f32 %v1703, %v1879
      %v1881 = vpop.f32.mrf.mxu0
      %v1882 = vpop.f32.mrf.mxu0
      %v1883 = vadd.f32 %v1706, %v1882
      %v1884 = vpop.f32.mrf.mxu0
      %1885 = vmatprep.mubr.bf16.mxu0 0
      %1886 = vmatmul.mubr.bf16.gmra.mxu0 %v1567
      %v1887 = vpop.f32.mrf.mxu0
      %v1888 = vadd.f32 %v1711, %v1887
      %v1889 = vpop.f32.mrf.mxu0
      %v1890 = vpop.f32.mrf.mxu0
      %v1891 = vadd.f32 %v1714, %v1890
      %v1892 = vpop.f32.mrf.mxu0
      %1893 = vmatprep.mubr.bf16.mxu0 0
      %1894 = vmatmul.mubr.bf16.gmra.mxu0 %v1570
      %v1895 = vpop.f32.mrf.mxu0
      %v1896 = vadd.f32 %v1719, %v1895
      %v1897 = vpop.f32.mrf.mxu0
      %v1898 = vpop.f32.mrf.mxu0
      %v1899 = vadd.f32 %v1722, %v1898
      %v1900 = vpop.f32.mrf.mxu0
      %1901 = vmatprep.mubr.bf16.mxu0 0
      %1902 = vmatmul.mubr.bf16.gmra.mxu0 %v1573
      %v1903 = vpop.f32.mrf.mxu0
      %v1904 = vadd.f32 %v1727, %v1903
      %v1905 = vpop.f32.mrf.mxu0
      %v1906 = vpop.f32.mrf.mxu0
      %v1907 = vadd.f32 %v1730, %v1906
      %v1908 = vpop.f32.mrf.mxu0
      %1909 = vmatprep.mubr.bf16.mxu0 0
      %1910 = vmatmul.mubr.bf16.gmra.mxu0 %v1576
      %v1911 = vpop.f32.mrf.mxu0
      %v1912 = vadd.f32 %v1735, %v1911
      %v1913 = vpop.f32.mrf.mxu0
      %v1914 = vpop.f32.mrf.mxu0
      %v1915 = vadd.f32 %v1738, %v1914
      %v1916 = vpop.f32.mrf.mxu0
      %1917 = vmatprep.mubr.bf16.mxu0 0
      %1918 = vmatmul.mubr.bf16.gmra.mxu0 %v1579
      %v1919 = vpop.f32.mrf.mxu0
      %v1920 = vadd.f32 %v1743, %v1919
      %v1921 = vpop.f32.mrf.mxu0
      %v1922 = vpop.f32.mrf.mxu0
      %v1923 = vadd.f32 %v1746, %v1922
      %v1924 = vpop.f32.mrf.mxu0
      %1925 = vdwg.mxu0
      %v1927 = vlaneseq
      %v1928 = vshrl.u32 %v1927, 7
      %v1929 = vsub.s32 0, %v1928
      %v1930 = vrot.slane %v1410, %v1929
      %v1932 = vadd.f32 %v1800, %v1930
      %v1933 = vadd.f32 %v1803, %v1930
      %v1934 = vadd.f32 %v1808, %v1930
      %v1935 = vadd.f32 %v1811, %v1930
      %v1936 = vadd.f32 %v1816, %v1930
      %v1937 = vadd.f32 %v1819, %v1930
      %v1938 = vadd.f32 %v1824, %v1930
      %v1939 = vadd.f32 %v1827, %v1930
      %v1940 = vadd.f32 %v1832, %v1930
      %v1941 = vadd.f32 %v1835, %v1930
      %v1942 = vadd.f32 %v1840, %v1930
      %v1943 = vadd.f32 %v1843, %v1930
      %v1944 = vadd.f32 %v1848, %v1930
      %v1945 = vadd.f32 %v1851, %v1930
      %v1946 = vadd.f32 %v1856, %v1930
      %v1947 = vadd.f32 %v1859, %v1930
      %v1948 = vadd.f32 %v1864, %v1930
      %v1949 = vadd.f32 %v1867, %v1930
      %v1950 = vadd.f32 %v1872, %v1930
      %v1951 = vadd.f32 %v1875, %v1930
      %v1952 = vadd.f32 %v1880, %v1930
      %v1953 = vadd.f32 %v1883, %v1930
      %v1954 = vadd.f32 %v1888, %v1930
      %v1955 = vadd.f32 %v1891, %v1930
      %v1956 = vadd.f32 %v1896, %v1930
      %v1957 = vadd.f32 %v1899, %v1930
      %v1958 = vadd.f32 %v1904, %v1930
      %v1959 = vadd.f32 %v1907, %v1930
      %v1960 = vadd.f32 %v1912, %v1930
      %v1961 = vadd.f32 %v1915, %v1930
      %v1962 = vadd.f32 %v1920, %v1930
      %v1963 = vadd.f32 %v1923, %v1930
      %v1964 = vmax.f32 %v1932, 0.0
      %v1965 = vmax.f32 %v1933, 0.0
      %v1966 = vmax.f32 %v1934, 0.0
      %v1967 = vmax.f32 %v1935, 0.0
      %v1968 = vmax.f32 %v1936, 0.0
      %v1969 = vmax.f32 %v1937, 0.0
      %v1970 = vmax.f32 %v1938, 0.0
      %v1971 = vmax.f32 %v1939, 0.0
      %v1972 = vmax.f32 %v1940, 0.0
      %v1973 = vmax.f32 %v1941, 0.0
      %v1974 = vmax.f32 %v1942, 0.0
      %v1975 = vmax.f32 %v1943, 0.0
      %v1976 = vmax.f32 %v1944, 0.0
      %v1977 = vmax.f32 %v1945, 0.0
      %v1978 = vmax.f32 %v1946, 0.0
      %v1979 = vmax.f32 %v1947, 0.0
      %v1980 = vmax.f32 %v1948, 0.0
      %v1981 = vmax.f32 %v1949, 0.0
      %v1982 = vmax.f32 %v1950, 0.0
      %v1983 = vmax.f32 %v1951, 0.0
      %v1984 = vmax.f32 %v1952, 0.0
      %v1985 = vmax.f32 %v1953, 0.0
      %v1986 = vmax.f32 %v1954, 0.0
      %v1987 = vmax.f32 %v1955, 0.0
      %v1988 = vmax.f32 %v1956, 0.0
      %v1989 = vmax.f32 %v1957, 0.0
      %v1990 = vmax.f32 %v1958, 0.0
      %v1991 = vmax.f32 %v1959, 0.0
      %v1992 = vmax.f32 %v1960, 0.0
      %v1993 = vmax.f32 %v1961, 0.0
      %v1994 = vmax.f32 %v1962, 0.0
      %v1995 = vmax.f32 %v1963, 0.0
      %v1996 = vpack.c.bf16 %v1965, %v1964
      %v1997 = vpack.c.bf16 %v1967, %v1966
      %v1998 = vpack.c.bf16 %v1969, %v1968
      %v1999 = vpack.c.bf16 %v1971, %v1970
      %v2000 = vpack.c.bf16 %v1973, %v1972
      %v2001 = vpack.c.bf16 %v1975, %v1974
      %v2002 = vpack.c.bf16 %v1977, %v1976
      %v2003 = vpack.c.bf16 %v1979, %v1978
      %v2004 = vpack.c.bf16 %v1981, %v1980
      %v2005 = vpack.c.bf16 %v1983, %v1982
      %v2006 = vpack.c.bf16 %v1985, %v1984
      %v2007 = vpack.c.bf16 %v1987, %v1986
      %v2008 = vpack.c.bf16 %v1989, %v1988
      %v2009 = vpack.c.bf16 %v1991, %v1990
      %v2010 = vpack.c.bf16 %v1993, %v1992
      %v2011 = vpack.c.bf16 %v1995, %v1994
      %v2028 = vunpack.c.l.b16 %v1996
      %v2029 = vunpack.c.h.b16 %v1996
      %v2030 = vunpack.c.l.b16 %v1997
      %v2031 = vunpack.c.h.b16 %v1997
      %v2032 = vunpack.c.l.b16 %v1998
      %v2033 = vunpack.c.h.b16 %v1998
      %v2034 = vunpack.c.l.b16 %v1999
      %v2035 = vunpack.c.h.b16 %v1999
      %v2036 = vunpack.c.l.b16 %v2000
      %v2037 = vunpack.c.h.b16 %v2000
      %v2038 = vunpack.c.l.b16 %v2001
      %v2039 = vunpack.c.h.b16 %v2001
      %v2040 = vunpack.c.l.b16 %v2002
      %v2041 = vunpack.c.h.b16 %v2002
      %v2042 = vunpack.c.l.b16 %v2003
      %v2043 = vunpack.c.h.b16 %v2003
      %v2044 = vunpack.c.l.b16 %v2004
      %v2045 = vunpack.c.h.b16 %v2004
      %v2046 = vunpack.c.l.b16 %v2005
      %v2047 = vunpack.c.h.b16 %v2005
      %v2048 = vunpack.c.l.b16 %v2006
      %v2049 = vunpack.c.h.b16 %v2006
      %v2050 = vunpack.c.l.b16 %v2007
      %v2051 = vunpack.c.h.b16 %v2007
      %v2052 = vunpack.c.l.b16 %v2008
      %v2053 = vunpack.c.h.b16 %v2008
      %v2054 = vunpack.c.l.b16 %v2009
      %v2055 = vunpack.c.h.b16 %v2009
      %v2056 = vunpack.c.l.b16 %v2010
      %v2057 = vunpack.c.h.b16 %v2010
      %v2058 = vunpack.c.l.b16 %v2011
      %v2059 = vunpack.c.h.b16 %v2011
      %v2060 = vpack.c.b16 %v2028, %v2028
      %v2061 = vpack.c.b16 %v2029, %v2029
      %v2062 = vpack.c.b16 %v2030, %v2030
      %v2063 = vpack.c.b16 %v2031, %v2031
      %v2064 = vpack.c.b16 %v2032, %v2032
      %v2065 = vpack.c.b16 %v2033, %v2033
      %v2066 = vpack.c.b16 %v2034, %v2034
      %v2067 = vpack.c.b16 %v2035, %v2035
      %v2068 = vpack.c.b16 %v2036, %v2036
      %v2069 = vpack.c.b16 %v2037, %v2037
      %v2070 = vpack.c.b16 %v2038, %v2038
      %v2071 = vpack.c.b16 %v2039, %v2039
      %v2072 = vpack.c.b16 %v2040, %v2040
      %v2073 = vpack.c.b16 %v2041, %v2041
      %v2074 = vpack.c.b16 %v2042, %v2042
      %v2075 = vpack.c.b16 %v2043, %v2043
      %v2076 = vpack.c.b16 %v2044, %v2044
      %v2077 = vpack.c.b16 %v2045, %v2045
      %v2078 = vpack.c.b16 %v2046, %v2046
      %v2079 = vpack.c.b16 %v2047, %v2047
      %v2080 = vpack.c.b16 %v2048, %v2048
      %v2081 = vpack.c.b16 %v2049, %v2049
      %v2082 = vpack.c.b16 %v2050, %v2050
      %v2083 = vpack.c.b16 %v2051, %v2051
      %v2084 = vpack.c.b16 %v2052, %v2052
      %v2085 = vpack.c.b16 %v2053, %v2053
      %v2086 = vpack.c.b16 %v2054, %v2054
      %v2087 = vpack.c.b16 %v2055, %v2055
      %v2088 = vpack.c.b16 %v2056, %v2056
      %v2089 = vpack.c.b16 %v2057, %v2057
      %v2090 = vpack.c.b16 %v2058, %v2058
      %v2091 = vpack.c.b16 %v2059, %v2059
      %vm2124 = vcmask 125952
      %2125 = vst.msk [vmem:[%s318] sm:$0xf] %vm2124, %v2060
      %2126 = vst.msk [vmem:[%s318 + $0x4] sm:$0xf] %vm2124, %v2061
      %2127 = vst.msk [vmem:[%s318 + $0x10] sm:$0xf] %vm2124, %v2062
      %2128 = vst.msk [vmem:[%s318 + $0x14] sm:$0xf] %vm2124, %v2063
      %2129 = vst.msk [vmem:[%s318 + $0x20] sm:$0xf] %vm2124, %v2064
      %2130 = vst.msk [vmem:[%s318 + $0x24] sm:$0xf] %vm2124, %v2065
      %2131 = vst.msk [vmem:[%s318 + $0x30] sm:$0xf] %vm2124, %v2066
      %2132 = vst.msk [vmem:[%s318 + $0x34] sm:$0xf] %vm2124, %v2067
      %2133 = vst.msk [vmem:[%s318 + $0x40] sm:$0xf] %vm2124, %v2068
      %2134 = vst.msk [vmem:[%s318 + $0x44] sm:$0xf] %vm2124, %v2069
      %2135 = vst.msk [vmem:[%s318 + $0x50] sm:$0xf] %vm2124, %v2070
      %2136 = vst.msk [vmem:[%s318 + $0x54] sm:$0xf] %vm2124, %v2071
      %2137 = vst.msk [vmem:[%s318 + $0x60] sm:$0xf] %vm2124, %v2072
      %2138 = vst.msk [vmem:[%s318 + $0x64] sm:$0xf] %vm2124, %v2073
      %2139 = vst.msk [vmem:[%s318 + $0x70] sm:$0xf] %vm2124, %v2074
      %2140 = vst.msk [vmem:[%s318 + $0x74] sm:$0xf] %vm2124, %v2075
      %2141 = vst.msk [vmem:[%s318 + $0x80] sm:$0xf] %vm2124, %v2076
      %2142 = vst.msk [vmem:[%s318 + $0x84] sm:$0xf] %vm2124, %v2077
      %2143 = vst.msk [vmem:[%s318 + $0x90] sm:$0xf] %vm2124, %v2078
      %2144 = vst.msk [vmem:[%s318 + $0x94] sm:$0xf] %vm2124, %v2079
      %2145 = vst.msk [vmem:[%s318 + $0xa0] sm:$0xf] %vm2124, %v2080
      %2146 = vst.msk [vmem:[%s318 + $0xa4] sm:$0xf] %vm2124, %v2081
      %2147 = vst.msk [vmem:[%s318 + $0xb0] sm:$0xf] %vm2124, %v2082
      %2148 = vst.msk [vmem:[%s318 + $0xb4] sm:$0xf] %vm2124, %v2083
      %2149 = vst.msk [vmem:[%s318 + $0xc0] sm:$0xf] %vm2124, %v2084
      %2150 = vst.msk [vmem:[%s318 + $0xc4] sm:$0xf] %vm2124, %v2085
      %2151 = vst.msk [vmem:[%s318 + $0xd0] sm:$0xf] %vm2124, %v2086
      %2152 = vst.msk [vmem:[%s318 + $0xd4] sm:$0xf] %vm2124, %v2087
      %2153 = vst.msk [vmem:[%s318 + $0xe0] sm:$0xf] %vm2124, %v2088
      %2154 = vst.msk [vmem:[%s318 + $0xe4] sm:$0xf] %vm2124, %v2089
      %2155 = vst.msk [vmem:[%s318 + $0xf0] sm:$0xf] %vm2124, %v2090
      %2156 = vst.msk [vmem:[%s318 + $0xf4] sm:$0xf] %vm2124, %v2091
      %v2157 = vld [vmem:[#allocation2 + $0x8] sm:$0xf]
      %v2158 = vld [vmem:[#allocation2 + $0xc] sm:$0xf]
      %v2159 = vld [vmem:[#allocation2 + $0x10] sm:$0xf]
      %v2160 = vld [vmem:[#allocation2 + $0x14] sm:$0xf]
      %v2161 = vld [vmem:[#allocation2 + $0x18] sm:$0xf]
      %v2162 = vld [vmem:[#allocation2 + $0x1c] sm:$0xf]
      %v2163 = vld [vmem:[#allocation2 + $0x20] sm:$0xf]
      %v2164 = vld [vmem:[#allocation2 + $0x24] sm:$0xf]
      %v2165 = vld [vmem:[#allocation2 + $0x28] sm:$0xf]
      %v2166 = vld [vmem:[#allocation2 + $0x2c] sm:$0xf]
      %v2167 = vld [vmem:[#allocation2 + $0x30] sm:$0xf]
      %v2168 = vld [vmem:[#allocation2 + $0x34] sm:$0xf]
      %v2169 = vld [vmem:[#allocation2 + $0x38] sm:$0xf]
      %v2170 = vld [vmem:[#allocation2 + $0x3c] sm:$0xf]
      %v2171 = vld [vmem:[#allocation2 + $0x40] sm:$0xf]
      %v2172 = vld [vmem:[#allocation2 + $0x44] sm:$0xf]
      %v2173 = vld [vmem:[#allocation2 + $0x48] sm:$0xf]
      %v2174 = vld [vmem:[#allocation2 + $0x4c] sm:$0xf]
      %v2175 = vld [vmem:[#allocation2 + $0x50] sm:$0xf]
      %v2176 = vld [vmem:[#allocation2 + $0x54] sm:$0xf]
      %v2177 = vld [vmem:[#allocation2 + $0x58] sm:$0xf]
      %v2178 = vld [vmem:[#allocation2 + $0x5c] sm:$0xf]
      %v2179 = vld [vmem:[#allocation2 + $0x60] sm:$0xf]
      %v2180 = vld [vmem:[#allocation2 + $0x64] sm:$0xf]
      %v2181 = vld [vmem:[#allocation2 + $0x68] sm:$0xf]
      %v2182 = vld [vmem:[#allocation2 + $0x6c] sm:$0xf]
      %v2183 = vld [vmem:[#allocation2 + $0x70] sm:$0xf]
      %v2184 = vld [vmem:[#allocation2 + $0x74] sm:$0xf]
      %v2185 = vld [vmem:[#allocation2 + $0x78] sm:$0xf]
      %v2186 = vld [vmem:[#allocation2 + $0x7c] sm:$0xf]
      %v2187 = vld [vmem:[#allocation2 + $0x80] sm:$0xf]
      %v2188 = vld [vmem:[#allocation2 + $0x84] sm:$0xf]
      %v2189 = vld [vmem:[#allocation2 + $0x88] sm:$0xf]
      %v2190 = vld [vmem:[#allocation2 + $0x8c] sm:$0xf]
      %s2191 = scalar_lea.vmem %s2, 16
      %v2192 = vld [vmem:[%s2191] sm:$0xf]
      %v2193 = vld [vmem:[%s2191 + $0x4] sm:$0x3]
      %s2194 = scalar_lea.vmem %s2, 24
      %v2195 = vld [vmem:[%s2194] sm:$0xf]
      %v2196 = vld [vmem:[%s2194 + $0x4] sm:$0x3]
      %v2229 = vunpack.c.l.b16 %v2159
      %v2230 = vunpack.c.l.b16 %v2160
      %v2231 = vunpack.c.l.b16 %v2161
      %v2232 = vunpack.c.l.b16 %v2162
      %v2233 = vunpack.c.l.b16 %v2163
      %v2234 = vunpack.c.l.b16 %v2164
      %v2235 = vunpack.c.l.b16 %v2165
      %v2236 = vunpack.c.l.b16 %v2166
      %v2237 = vunpack.c.l.b16 %v2167
      %v2238 = vunpack.c.l.b16 %v2168
      %v2239 = vunpack.c.l.b16 %v2169
      %v2240 = vunpack.c.l.b16 %v2170
      %v2241 = vunpack.c.l.b16 %v2171
      %v2242 = vunpack.c.l.b16 %v2172
      %v2243 = vunpack.c.l.b16 %v2173
      %v2244 = vunpack.c.l.b16 %v2174
      %v2245 = vunpack.c.l.b16 %v2175
      %v2246 = vunpack.c.l.b16 %v2176
      %v2247 = vunpack.c.l.b16 %v2177
      %v2248 = vunpack.c.l.b16 %v2178
      %v2249 = vunpack.c.l.b16 %v2179
      %v2250 = vunpack.c.l.b16 %v2180
      %v2251 = vunpack.c.l.b16 %v2181
      %v2252 = vunpack.c.l.b16 %v2182
      %v2253 = vunpack.c.l.b16 %v2183
      %v2254 = vunpack.c.l.b16 %v2184
      %v2255 = vunpack.c.l.b16 %v2185
      %v2256 = vunpack.c.l.b16 %v2186
      %v2257 = vunpack.c.l.b16 %v2187
      %v2258 = vunpack.c.l.b16 %v2188
      %v2259 = vunpack.c.l.b16 %v2189
      %v2260 = vunpack.c.l.b16 %v2190
      %v2261 = vpack.c.b16 %v2230, %v2229
      %v2262 = vpack.c.b16 %v2232, %v2231
      %v2263 = vpack.c.b16 %v2234, %v2233
      %v2264 = vpack.c.b16 %v2236, %v2235
      %v2265 = vpack.c.b16 %v2238, %v2237
      %v2266 = vpack.c.b16 %v2240, %v2239
      %v2267 = vpack.c.b16 %v2242, %v2241
      %v2268 = vpack.c.b16 %v2244, %v2243
      %v2269 = vpack.c.b16 %v2246, %v2245
      %v2270 = vpack.c.b16 %v2248, %v2247
      %v2271 = vpack.c.b16 %v2250, %v2249
      %v2272 = vpack.c.b16 %v2252, %v2251
      %v2273 = vpack.c.b16 %v2254, %v2253
      %v2274 = vpack.c.b16 %v2256, %v2255
      %v2275 = vpack.c.b16 %v2258, %v2257
      %v2276 = vpack.c.b16 %v2260, %v2259
      %v2279 = vunpack.c.l.b16 %v2195
      %v2280 = vunpack.c.l.b16 %v2196
      %v2281 = vpack.c.b16 %v2280, %v2279
      %v2283 = vsel %vm1535, %v2261, 0
      %v2286 = vsel %vm1535, %v2262, 0
      %v2289 = vsel %vm1535, %v2263, 0
      %v2292 = vsel %vm1535, %v2264, 0
      %v2295 = vsel %vm1535, %v2265, 0
      %v2298 = vsel %vm1535, %v2266, 0
      %v2301 = vsel %vm1535, %v2267, 0
      %v2304 = vsel %vm1535, %v2268, 0
      %v2307 = vsel %vm1535, %v2269, 0
      %v2310 = vsel %vm1535, %v2270, 0
      %v2313 = vsel %vm1535, %v2271, 0
      %v2316 = vsel %vm1535, %v2272, 0
      %v2319 = vsel %vm1535, %v2273, 0
      %v2322 = vsel %vm1535, %v2274, 0
      %v2325 = vsel %vm1535, %v2275, 0
      %v2328 = vsel %vm1535, %v2276, 0
      %v2331 = vsel %vm1584, %v2281, 0
      %2333 = vmatprep.subr.bf16.mxu0 0
      %2334 = vmatpush1.bf16.msra.mxu0 0
      %2335 = vmatprep.subr.bf16.mxu0 0
      %2336 = vmatpush1.bf16.msra.mxu0 0
      %2337 = vmatprep.subr.bf16.mxu0 0
      %2338 = vmatpush1.bf16.msra.mxu0 0
      %2339 = vmatprep.subr.bf16.mxu0 0
      %2340 = vmatpush1.bf16.msra.mxu0 0
      %2341 = vmatprep.subr.bf16.mxu0 0
      %2342 = vmatpush1.bf16.msra.mxu0 0
      %2343 = vmatprep.subr.bf16.mxu0 0
      %2344 = vmatpush1.bf16.msra.mxu0 0
      %2345 = vmatprep.subr.bf16.mxu0 0
      %2346 = vmatpush1.bf16.msra.mxu0 0
      %2347 = vmatprep.subr.bf16.mxu0 0
      %2348 = vmatpush1.bf16.msra.mxu0 %v2331
      %2349 = vmatprep.subr.bf16.mxu0 0
      %2350 = vmatpush2.bf16.msra.mxu0 0
      %2351 = vmatprep.subr.bf16.mxu0 0
      %2352 = vmatpush2.bf16.msra.mxu0 0
      %2353 = vmatprep.subr.bf16.mxu0 0
      %2354 = vmatpush2.bf16.msra.mxu0 0
      %2355 = vmatprep.subr.bf16.mxu0 0
      %2356 = vmatpush2.bf16.msra.mxu0 0
      %2357 = vmatprep.subr.bf16.mxu0 0
      %2358 = vmatpush2.bf16.msra.mxu0 0
      %2359 = vmatprep.subr.bf16.mxu0 0
      %2360 = vmatpush2.bf16.msra.mxu0 0
      %2361 = vmatprep.subr.bf16.mxu0 0
      %2362 = vmatpush2.bf16.msra.mxu0 0
      %2363 = vmatprep.subr.bf16.mxu0 0
      %2364 = vmatpush2.bf16.msra.mxu0 0
      %2365 = vmatprep.mubr.bf16.mxu0 0
      %2366 = vmatmul.mubr.bf16.gmra.mxu0 %v2283
      %v2367 = vpop.f32.mrf.mxu0
      %v2368 = vadd.f32 0.0, %v2367
      %v2369 = vpop.f32.mrf.mxu0
      %v2370 = vpop.f32.mrf.mxu0
      %v2371 = vadd.f32 0.0, %v2370
      %v2372 = vpop.f32.mrf.mxu0
      %2373 = vmatprep.mubr.bf16.mxu0 0
      %2374 = vmatmul.mubr.bf16.gmra.mxu0 %v2286
      %v2375 = vpop.f32.mrf.mxu0
      %v2376 = vadd.f32 0.0, %v2375
      %v2377 = vpop.f32.mrf.mxu0
      %v2378 = vpop.f32.mrf.mxu0
      %v2379 = vadd.f32 0.0, %v2378
      %v2380 = vpop.f32.mrf.mxu0
      %2381 = vmatprep.mubr.bf16.mxu0 0
      %2382 = vmatmul.mubr.bf16.gmra.mxu0 %v2289
      %v2383 = vpop.f32.mrf.mxu0
      %v2384 = vadd.f32 0.0, %v2383
      %v2385 = vpop.f32.mrf.mxu0
      %v2386 = vpop.f32.mrf.mxu0
      %v2387 = vadd.f32 0.0, %v2386
      %v2388 = vpop.f32.mrf.mxu0
      %2389 = vmatprep.mubr.bf16.mxu0 0
      %2390 = vmatmul.mubr.bf16.gmra.mxu0 %v2292
      %v2391 = vpop.f32.mrf.mxu0
      %v2392 = vadd.f32 0.0, %v2391
      %v2393 = vpop.f32.mrf.mxu0
      %v2394 = vpop.f32.mrf.mxu0
      %v2395 = vadd.f32 0.0, %v2394
      %v2396 = vpop.f32.mrf.mxu0
      %2397 = vmatprep.mubr.bf16.mxu0 0
      %2398 = vmatmul.mubr.bf16.gmra.mxu0 %v2295
      %v2399 = vpop.f32.mrf.mxu0
      %v2400 = vadd.f32 0.0, %v2399
      %v2401 = vpop.f32.mrf.mxu0
      %v2402 = vpop.f32.mrf.mxu0
      %v2403 = vadd.f32 0.0, %v2402
      %v2404 = vpop.f32.mrf.mxu0
      %2405 = vmatprep.mubr.bf16.mxu0 0
      %2406 = vmatmul.mubr.bf16.gmra.mxu0 %v2298
      %v2407 = vpop.f32.mrf.mxu0
      %v2408 = vadd.f32 0.0, %v2407
      %v2409 = vpop.f32.mrf.mxu0
      %v2410 = vpop.f32.mrf.mxu0
      %v2411 = vadd.f32 0.0, %v2410
      %v2412 = vpop.f32.mrf.mxu0
      %2413 = vmatprep.mubr.bf16.mxu0 0
      %2414 = vmatmul.mubr.bf16.gmra.mxu0 %v2301
      %v2415 = vpop.f32.mrf.mxu0
      %v2416 = vadd.f32 0.0, %v2415
      %v2417 = vpop.f32.mrf.mxu0
      %v2418 = vpop.f32.mrf.mxu0
      %v2419 = vadd.f32 0.0, %v2418
      %v2420 = vpop.f32.mrf.mxu0
      %2421 = vmatprep.mubr.bf16.mxu0 0
      %2422 = vmatmul.mubr.bf16.gmra.mxu0 %v2304
      %v2423 = vpop.f32.mrf.mxu0
      %v2424 = vadd.f32 0.0, %v2423
      %v2425 = vpop.f32.mrf.mxu0
      %v2426 = vpop.f32.mrf.mxu0
      %v2427 = vadd.f32 0.0, %v2426
      %v2428 = vpop.f32.mrf.mxu0
      %2429 = vmatprep.mubr.bf16.mxu0 0
      %2430 = vmatmul.mubr.bf16.gmra.mxu0 %v2307
      %v2431 = vpop.f32.mrf.mxu0
      %v2432 = vadd.f32 0.0, %v2431
      %v2433 = vpop.f32.mrf.mxu0
      %v2434 = vpop.f32.mrf.mxu0
      %v2435 = vadd.f32 0.0, %v2434
      %v2436 = vpop.f32.mrf.mxu0
      %2437 = vmatprep.mubr.bf16.mxu0 0
      %2438 = vmatmul.mubr.bf16.gmra.mxu0 %v2310
      %v2439 = vpop.f32.mrf.mxu0
      %v2440 = vadd.f32 0.0, %v2439
      %v2441 = vpop.f32.mrf.mxu0
      %v2442 = vpop.f32.mrf.mxu0
      %v2443 = vadd.f32 0.0, %v2442
      %v2444 = vpop.f32.mrf.mxu0
      %2445 = vmatprep.mubr.bf16.mxu0 0
      %2446 = vmatmul.mubr.bf16.gmra.mxu0 %v2313
      %v2447 = vpop.f32.mrf.mxu0
      %v2448 = vadd.f32 0.0, %v2447
      %v2449 = vpop.f32.mrf.mxu0
      %v2450 = vpop.f32.mrf.mxu0
      %v2451 = vadd.f32 0.0, %v2450
      %v2452 = vpop.f32.mrf.mxu0
      %2453 = vmatprep.mubr.bf16.mxu0 0
      %2454 = vmatmul.mubr.bf16.gmra.mxu0 %v2316
      %v2455 = vpop.f32.mrf.mxu0
      %v2456 = vadd.f32 0.0, %v2455
      %v2457 = vpop.f32.mrf.mxu0
      %v2458 = vpop.f32.mrf.mxu0
      %v2459 = vadd.f32 0.0, %v2458
      %v2460 = vpop.f32.mrf.mxu0
      %2461 = vmatprep.mubr.bf16.mxu0 0
      %2462 = vmatmul.mubr.bf16.gmra.mxu0 %v2319
      %v2463 = vpop.f32.mrf.mxu0
      %v2464 = vadd.f32 0.0, %v2463
      %v2465 = vpop.f32.mrf.mxu0
      %v2466 = vpop.f32.mrf.mxu0
      %v2467 = vadd.f32 0.0, %v2466
      %v2468 = vpop.f32.mrf.mxu0
      %2469 = vmatprep.mubr.bf16.mxu0 0
      %2470 = vmatmul.mubr.bf16.gmra.mxu0 %v2322
      %v2471 = vpop.f32.mrf.mxu0
      %v2472 = vadd.f32 0.0, %v2471
      %v2473 = vpop.f32.mrf.mxu0
      %v2474 = vpop.f32.mrf.mxu0
      %v2475 = vadd.f32 0.0, %v2474
      %v2476 = vpop.f32.mrf.mxu0
      %2477 = vmatprep.mubr.bf16.mxu0 0
      %2478 = vmatmul.mubr.bf16.gmra.mxu0 %v2325
      %v2479 = vpop.f32.mrf.mxu0
      %v2480 = vadd.f32 0.0, %v2479
      %v2481 = vpop.f32.mrf.mxu0
      %v2482 = vpop.f32.mrf.mxu0
      %v2483 = vadd.f32 0.0, %v2482
      %v2484 = vpop.f32.mrf.mxu0
      %2485 = vmatprep.mubr.bf16.mxu0 0
      %2486 = vmatmul.mubr.bf16.gmra.mxu0 %v2328
      %v2487 = vpop.f32.mrf.mxu0
      %v2488 = vadd.f32 0.0, %v2487
      %v2489 = vpop.f32.mrf.mxu0
      %v2490 = vpop.f32.mrf.mxu0
      %v2491 = vadd.f32 0.0, %v2490
      %v2492 = vpop.f32.mrf.mxu0
      %2493 = vdwg.mxu0
      %v2496 = vunpack.c.l.b16 %v2157
      %v2497 = vunpack.c.l.b16 %v2158
      %v2498 = vpack.c.b16 %v2497, %v2496
      %v2501 = vunpack.c.l.b16 %v2192
      %v2502 = vunpack.c.l.b16 %v2193
      %v2503 = vpack.c.b16 %v2502, %v2501
      %v2505 = vsel %vm1535, %v2498, 0
      %v2508 = vsel %vm1584, %v2503, 0
      %2510 = vmatprep.subr.bf16.mxu0 0
      %2511 = vmatpush1.bf16.msra.mxu0 0
      %2512 = vmatprep.subr.bf16.mxu0 0
      %2513 = vmatpush1.bf16.msra.mxu0 0
      %2514 = vmatprep.subr.bf16.mxu0 0
      %2515 = vmatpush1.bf16.msra.mxu0 0
      %2516 = vmatprep.subr.bf16.mxu0 0
      %2517 = vmatpush1.bf16.msra.mxu0 0
      %2518 = vmatprep.subr.bf16.mxu0 0
      %2519 = vmatpush1.bf16.msra.mxu0 0
      %2520 = vmatprep.subr.bf16.mxu0 0
      %2521 = vmatpush1.bf16.msra.mxu0 0
      %2522 = vmatprep.subr.bf16.mxu0 0
      %2523 = vmatpush1.bf16.msra.mxu0 0
      %2524 = vmatprep.subr.bf16.mxu0 0
      %2525 = vmatpush1.bf16.msra.mxu0 %v2508
      %2526 = vmatprep.subr.bf16.mxu0 0
      %2527 = vmatpush2.bf16.msra.mxu0 0
      %2528 = vmatprep.subr.bf16.mxu0 0
      %2529 = vmatpush2.bf16.msra.mxu0 0
      %2530 = vmatprep.subr.bf16.mxu0 0
      %2531 = vmatpush2.bf16.msra.mxu0 0
      %2532 = vmatprep.subr.bf16.mxu0 0
      %2533 = vmatpush2.bf16.msra.mxu0 0
      %2534 = vmatprep.subr.bf16.mxu0 0
      %2535 = vmatpush2.bf16.msra.mxu0 0
      %2536 = vmatprep.subr.bf16.mxu0 0
      %2537 = vmatpush2.bf16.msra.mxu0 0
      %2538 = vmatprep.subr.bf16.mxu0 0
      %2539 = vmatpush2.bf16.msra.mxu0 0
      %2540 = vmatprep.subr.bf16.mxu0 0
      %2541 = vmatpush2.bf16.msra.mxu0 0
      %2542 = vmatprep.mubr.bf16.mxu0 0
      %2543 = vmatmul.mubr.bf16.gmra.mxu0 %v2505
      %v2544 = vpop.f32.mrf.mxu0
      %v2545 = vadd.f32 %v2368, %v2544
      %v2546 = vpop.f32.mrf.mxu0
      %v2547 = vpop.f32.mrf.mxu0
      %v2548 = vadd.f32 %v2371, %v2547
      %v2549 = vpop.f32.mrf.mxu0
      %2550 = vmatprep.mubr.bf16.mxu0 0
      %2551 = vmatmul.mubr.bf16.gmra.mxu0 %v2283
      %v2552 = vpop.f32.mrf.mxu0
      %v2553 = vadd.f32 %v2376, %v2552
      %v2554 = vpop.f32.mrf.mxu0
      %v2555 = vpop.f32.mrf.mxu0
      %v2556 = vadd.f32 %v2379, %v2555
      %v2557 = vpop.f32.mrf.mxu0
      %2558 = vmatprep.mubr.bf16.mxu0 0
      %2559 = vmatmul.mubr.bf16.gmra.mxu0 %v2286
      %v2560 = vpop.f32.mrf.mxu0
      %v2561 = vadd.f32 %v2384, %v2560
      %v2562 = vpop.f32.mrf.mxu0
      %v2563 = vpop.f32.mrf.mxu0
      %v2564 = vadd.f32 %v2387, %v2563
      %v2565 = vpop.f32.mrf.mxu0
      %2566 = vmatprep.mubr.bf16.mxu0 0
      %2567 = vmatmul.mubr.bf16.gmra.mxu0 %v2289
      %v2568 = vpop.f32.mrf.mxu0
      %v2569 = vadd.f32 %v2392, %v2568
      %v2570 = vpop.f32.mrf.mxu0
      %v2571 = vpop.f32.mrf.mxu0
      %v2572 = vadd.f32 %v2395, %v2571
      %v2573 = vpop.f32.mrf.mxu0
      %2574 = vmatprep.mubr.bf16.mxu0 0
      %2575 = vmatmul.mubr.bf16.gmra.mxu0 %v2292
      %v2576 = vpop.f32.mrf.mxu0
      %v2577 = vadd.f32 %v2400, %v2576
      %v2578 = vpop.f32.mrf.mxu0
      %v2579 = vpop.f32.mrf.mxu0
      %v2580 = vadd.f32 %v2403, %v2579
      %v2581 = vpop.f32.mrf.mxu0
      %2582 = vmatprep.mubr.bf16.mxu0 0
      %2583 = vmatmul.mubr.bf16.gmra.mxu0 %v2295
      %v2584 = vpop.f32.mrf.mxu0
      %v2585 = vadd.f32 %v2408, %v2584
      %v2586 = vpop.f32.mrf.mxu0
      %v2587 = vpop.f32.mrf.mxu0
      %v2588 = vadd.f32 %v2411, %v2587
      %v2589 = vpop.f32.mrf.mxu0
      %2590 = vmatprep.mubr.bf16.mxu0 0
      %2591 = vmatmul.mubr.bf16.gmra.mxu0 %v2298
      %v2592 = vpop.f32.mrf.mxu0
      %v2593 = vadd.f32 %v2416, %v2592
      %v2594 = vpop.f32.mrf.mxu0
      %v2595 = vpop.f32.mrf.mxu0
      %v2596 = vadd.f32 %v2419, %v2595
      %v2597 = vpop.f32.mrf.mxu0
      %2598 = vmatprep.mubr.bf16.mxu0 0
      %2599 = vmatmul.mubr.bf16.gmra.mxu0 %v2301
      %v2600 = vpop.f32.mrf.mxu0
      %v2601 = vadd.f32 %v2424, %v2600
      %v2602 = vpop.f32.mrf.mxu0
      %v2603 = vpop.f32.mrf.mxu0
      %v2604 = vadd.f32 %v2427, %v2603
      %v2605 = vpop.f32.mrf.mxu0
      %2606 = vmatprep.mubr.bf16.mxu0 0
      %2607 = vmatmul.mubr.bf16.gmra.mxu0 %v2304
      %v2608 = vpop.f32.mrf.mxu0
      %v2609 = vadd.f32 %v2432, %v2608
      %v2610 = vpop.f32.mrf.mxu0
      %v2611 = vpop.f32.mrf.mxu0
      %v2612 = vadd.f32 %v2435, %v2611
      %v2613 = vpop.f32.mrf.mxu0
      %2614 = vmatprep.mubr.bf16.mxu0 0
      %2615 = vmatmul.mubr.bf16.gmra.mxu0 %v2307
      %v2616 = vpop.f32.mrf.mxu0
      %v2617 = vadd.f32 %v2440, %v2616
      %v2618 = vpop.f32.mrf.mxu0
      %v2619 = vpop.f32.mrf.mxu0
      %v2620 = vadd.f32 %v2443, %v2619
      %v2621 = vpop.f32.mrf.mxu0
      %2622 = vmatprep.mubr.bf16.mxu0 0
      %2623 = vmatmul.mubr.bf16.gmra.mxu0 %v2310
      %v2624 = vpop.f32.mrf.mxu0
      %v2625 = vadd.f32 %v2448, %v2624
      %v2626 = vpop.f32.mrf.mxu0
      %v2627 = vpop.f32.mrf.mxu0
      %v2628 = vadd.f32 %v2451, %v2627
      %v2629 = vpop.f32.mrf.mxu0
      %2630 = vmatprep.mubr.bf16.mxu0 0
      %2631 = vmatmul.mubr.bf16.gmra.mxu0 %v2313
      %v2632 = vpop.f32.mrf.mxu0
      %v2633 = vadd.f32 %v2456, %v2632
      %v2634 = vpop.f32.mrf.mxu0
      %v2635 = vpop.f32.mrf.mxu0
      %v2636 = vadd.f32 %v2459, %v2635
      %v2637 = vpop.f32.mrf.mxu0
      %2638 = vmatprep.mubr.bf16.mxu0 0
      %2639 = vmatmul.mubr.bf16.gmra.mxu0 %v2316
      %v2640 = vpop.f32.mrf.mxu0
      %v2641 = vadd.f32 %v2464, %v2640
      %v2642 = vpop.f32.mrf.mxu0
      %v2643 = vpop.f32.mrf.mxu0
      %v2644 = vadd.f32 %v2467, %v2643
      %v2645 = vpop.f32.mrf.mxu0
      %2646 = vmatprep.mubr.bf16.mxu0 0
      %2647 = vmatmul.mubr.bf16.gmra.mxu0 %v2319
      %v2648 = vpop.f32.mrf.mxu0
      %v2649 = vadd.f32 %v2472, %v2648
      %v2650 = vpop.f32.mrf.mxu0
      %v2651 = vpop.f32.mrf.mxu0
      %v2652 = vadd.f32 %v2475, %v2651
      %v2653 = vpop.f32.mrf.mxu0
      %2654 = vmatprep.mubr.bf16.mxu0 0
      %2655 = vmatmul.mubr.bf16.gmra.mxu0 %v2322
      %v2656 = vpop.f32.mrf.mxu0
      %v2657 = vadd.f32 %v2480, %v2656
      %v2658 = vpop.f32.mrf.mxu0
      %v2659 = vpop.f32.mrf.mxu0
      %v2660 = vadd.f32 %v2483, %v2659
      %v2661 = vpop.f32.mrf.mxu0
      %2662 = vmatprep.mubr.bf16.mxu0 0
      %2663 = vmatmul.mubr.bf16.gmra.mxu0 %v2325
      %v2664 = vpop.f32.mrf.mxu0
      %v2665 = vadd.f32 %v2488, %v2664
      %v2666 = vpop.f32.mrf.mxu0
      %v2667 = vpop.f32.mrf.mxu0
      %v2668 = vadd.f32 %v2491, %v2667
      %v2669 = vpop.f32.mrf.mxu0
      %2670 = vdwg.mxu0
      %v2671 = vadd.f32 %v2545, %v1930
      %v2672 = vadd.f32 %v2548, %v1930
      %v2673 = vadd.f32 %v2553, %v1930
      %v2674 = vadd.f32 %v2556, %v1930
      %v2675 = vadd.f32 %v2561, %v1930
      %v2676 = vadd.f32 %v2564, %v1930
      %v2677 = vadd.f32 %v2569, %v1930
      %v2678 = vadd.f32 %v2572, %v1930
      %v2679 = vadd.f32 %v2577, %v1930
      %v2680 = vadd.f32 %v2580, %v1930
      %v2681 = vadd.f32 %v2585, %v1930
      %v2682 = vadd.f32 %v2588, %v1930
      %v2683 = vadd.f32 %v2593, %v1930
      %v2684 = vadd.f32 %v2596, %v1930
      %v2685 = vadd.f32 %v2601, %v1930
      %v2686 = vadd.f32 %v2604, %v1930
      %v2687 = vadd.f32 %v2609, %v1930
      %v2688 = vadd.f32 %v2612, %v1930
      %v2689 = vadd.f32 %v2617, %v1930
      %v2690 = vadd.f32 %v2620, %v1930
      %v2691 = vadd.f32 %v2625, %v1930
      %v2692 = vadd.f32 %v2628, %v1930
      %v2693 = vadd.f32 %v2633, %v1930
      %v2694 = vadd.f32 %v2636, %v1930
      %v2695 = vadd.f32 %v2641, %v1930
      %v2696 = vadd.f32 %v2644, %v1930
      %v2697 = vadd.f32 %v2649, %v1930
      %v2698 = vadd.f32 %v2652, %v1930
      %v2699 = vadd.f32 %v2657, %v1930
      %v2700 = vadd.f32 %v2660, %v1930
      %v2701 = vadd.f32 %v2665, %v1930
      %v2702 = vadd.f32 %v2668, %v1930
      %v2703 = vmax.f32 %v2671, 0.0
      %v2704 = vmax.f32 %v2672, 0.0
      %v2705 = vmax.f32 %v2673, 0.0
      %v2706 = vmax.f32 %v2674, 0.0
      %v2707 = vmax.f32 %v2675, 0.0
      %v2708 = vmax.f32 %v2676, 0.0
      %v2709 = vmax.f32 %v2677, 0.0
      %v2710 = vmax.f32 %v2678, 0.0
      %v2711 = vmax.f32 %v2679, 0.0
      %v2712 = vmax.f32 %v2680, 0.0
      %v2713 = vmax.f32 %v2681, 0.0
      %v2714 = vmax.f32 %v2682, 0.0
      %v2715 = vmax.f32 %v2683, 0.0
      %v2716 = vmax.f32 %v2684, 0.0
      %v2717 = vmax.f32 %v2685, 0.0
      %v2718 = vmax.f32 %v2686, 0.0
      %v2719 = vmax.f32 %v2687, 0.0
      %v2720 = vmax.f32 %v2688, 0.0
      %v2721 = vmax.f32 %v2689, 0.0
      %v2722 = vmax.f32 %v2690, 0.0
      %v2723 = vmax.f32 %v2691, 0.0
      %v2724 = vmax.f32 %v2692, 0.0
      %v2725 = vmax.f32 %v2693, 0.0
      %v2726 = vmax.f32 %v2694, 0.0
      %v2727 = vmax.f32 %v2695, 0.0
      %v2728 = vmax.f32 %v2696, 0.0
      %v2729 = vmax.f32 %v2697, 0.0
      %v2730 = vmax.f32 %v2698, 0.0
      %v2731 = vmax.f32 %v2699, 0.0
      %v2732 = vmax.f32 %v2700, 0.0
      %v2733 = vmax.f32 %v2701, 0.0
      %v2734 = vmax.f32 %v2702, 0.0
      %v2735 = vpack.c.bf16 %v2704, %v2703
      %v2736 = vpack.c.bf16 %v2706, %v2705
      %v2737 = vpack.c.bf16 %v2708, %v2707
      %v2738 = vpack.c.bf16 %v2710, %v2709
      %v2739 = vpack.c.bf16 %v2712, %v2711
      %v2740 = vpack.c.bf16 %v2714, %v2713
      %v2741 = vpack.c.bf16 %v2716, %v2715
      %v2742 = vpack.c.bf16 %v2718, %v2717
      %v2743 = vpack.c.bf16 %v2720, %v2719
      %v2744 = vpack.c.bf16 %v2722, %v2721
      %v2745 = vpack.c.bf16 %v2724, %v2723
      %v2746 = vpack.c.bf16 %v2726, %v2725
      %v2747 = vpack.c.bf16 %v2728, %v2727
      %v2748 = vpack.c.bf16 %v2730, %v2729
      %v2749 = vpack.c.bf16 %v2732, %v2731
      %v2750 = vpack.c.bf16 %v2734, %v2733
      %v2767 = vunpack.c.l.b16 %v2735
      %v2768 = vunpack.c.h.b16 %v2735
      %v2769 = vunpack.c.l.b16 %v2736
      %v2770 = vunpack.c.h.b16 %v2736
      %v2771 = vunpack.c.l.b16 %v2737
      %v2772 = vunpack.c.h.b16 %v2737
      %v2773 = vunpack.c.l.b16 %v2738
      %v2774 = vunpack.c.h.b16 %v2738
      %v2775 = vunpack.c.l.b16 %v2739
      %v2776 = vunpack.c.h.b16 %v2739
      %v2777 = vunpack.c.l.b16 %v2740
      %v2778 = vunpack.c.h.b16 %v2740
      %v2779 = vunpack.c.l.b16 %v2741
      %v2780 = vunpack.c.h.b16 %v2741
      %v2781 = vunpack.c.l.b16 %v2742
      %v2782 = vunpack.c.h.b16 %v2742
      %v2783 = vunpack.c.l.b16 %v2743
      %v2784 = vunpack.c.h.b16 %v2743
      %v2785 = vunpack.c.l.b16 %v2744
      %v2786 = vunpack.c.h.b16 %v2744
      %v2787 = vunpack.c.l.b16 %v2745
      %v2788 = vunpack.c.h.b16 %v2745
      %v2789 = vunpack.c.l.b16 %v2746
      %v2790 = vunpack.c.h.b16 %v2746
      %v2791 = vunpack.c.l.b16 %v2747
      %v2792 = vunpack.c.h.b16 %v2747
      %v2793 = vunpack.c.l.b16 %v2748
      %v2794 = vunpack.c.h.b16 %v2748
      %v2795 = vunpack.c.l.b16 %v2749
      %v2796 = vunpack.c.h.b16 %v2749
      %v2797 = vunpack.c.l.b16 %v2750
      %v2798 = vunpack.c.h.b16 %v2750
      %v2799 = vpack.c.b16 %v2767, %v2767
      %v2800 = vpack.c.b16 %v2768, %v2768
      %v2801 = vpack.c.b16 %v2769, %v2769
      %v2802 = vpack.c.b16 %v2770, %v2770
      %v2803 = vpack.c.b16 %v2771, %v2771
      %v2804 = vpack.c.b16 %v2772, %v2772
      %v2805 = vpack.c.b16 %v2773, %v2773
      %v2806 = vpack.c.b16 %v2774, %v2774
      %v2807 = vpack.c.b16 %v2775, %v2775
      %v2808 = vpack.c.b16 %v2776, %v2776
      %v2809 = vpack.c.b16 %v2777, %v2777
      %v2810 = vpack.c.b16 %v2778, %v2778
      %v2811 = vpack.c.b16 %v2779, %v2779
      %v2812 = vpack.c.b16 %v2780, %v2780
      %v2813 = vpack.c.b16 %v2781, %v2781
      %v2814 = vpack.c.b16 %v2782, %v2782
      %v2815 = vpack.c.b16 %v2783, %v2783
      %v2816 = vpack.c.b16 %v2784, %v2784
      %v2817 = vpack.c.b16 %v2785, %v2785
      %v2818 = vpack.c.b16 %v2786, %v2786
      %v2819 = vpack.c.b16 %v2787, %v2787
      %v2820 = vpack.c.b16 %v2788, %v2788
      %v2821 = vpack.c.b16 %v2789, %v2789
      %v2822 = vpack.c.b16 %v2790, %v2790
      %v2823 = vpack.c.b16 %v2791, %v2791
      %v2824 = vpack.c.b16 %v2792, %v2792
      %v2825 = vpack.c.b16 %v2793, %v2793
      %v2826 = vpack.c.b16 %v2794, %v2794
      %v2827 = vpack.c.b16 %v2795, %v2795
      %v2828 = vpack.c.b16 %v2796, %v2796
      %v2829 = vpack.c.b16 %v2797, %v2797
      %v2830 = vpack.c.b16 %v2798, %v2798
      %s2863 = scalar_lea.vmem %s318, 8
      %2864 = vst.msk [vmem:[%s2863] sm:$0xf] %vm2124, %v2799
      %2865 = vst.msk [vmem:[%s2863 + $0x4] sm:$0xf] %vm2124, %v2800
      %2866 = vst.msk [vmem:[%s2863 + $0x10] sm:$0xf] %vm2124, %v2801
      %2867 = vst.msk [vmem:[%s2863 + $0x14] sm:$0xf] %vm2124, %v2802
      %2868 = vst.msk [vmem:[%s2863 + $0x20] sm:$0xf] %vm2124, %v2803
      %2869 = vst.msk [vmem:[%s2863 + $0x24] sm:$0xf] %vm2124, %v2804
      %2870 = vst.msk [vmem:[%s2863 + $0x30] sm:$0xf] %vm2124, %v2805
      %2871 = vst.msk [vmem:[%s2863 + $0x34] sm:$0xf] %vm2124, %v2806
      %2872 = vst.msk [vmem:[%s2863 + $0x40] sm:$0xf] %vm2124, %v2807
      %2873 = vst.msk [vmem:[%s2863 + $0x44] sm:$0xf] %vm2124, %v2808
      %2874 = vst.msk [vmem:[%s2863 + $0x50] sm:$0xf] %vm2124, %v2809
      %2875 = vst.msk [vmem:[%s2863 + $0x54] sm:$0xf] %vm2124, %v2810
      %2876 = vst.msk [vmem:[%s2863 + $0x60] sm:$0xf] %vm2124, %v2811
      %2877 = vst.msk [vmem:[%s2863 + $0x64] sm:$0xf] %vm2124, %v2812
      %2878 = vst.msk [vmem:[%s2863 + $0x70] sm:$0xf] %vm2124, %v2813
      %2879 = vst.msk [vmem:[%s2863 + $0x74] sm:$0xf] %vm2124, %v2814
      %2880 = vst.msk [vmem:[%s2863 + $0x80] sm:$0xf] %vm2124, %v2815
      %2881 = vst.msk [vmem:[%s2863 + $0x84] sm:$0xf] %vm2124, %v2816
      %2882 = vst.msk [vmem:[%s2863 + $0x90] sm:$0xf] %vm2124, %v2817
      %2883 = vst.msk [vmem:[%s2863 + $0x94] sm:$0xf] %vm2124, %v2818
      %2884 = vst.msk [vmem:[%s2863 + $0xa0] sm:$0xf] %vm2124, %v2819
      %2885 = vst.msk [vmem:[%s2863 + $0xa4] sm:$0xf] %vm2124, %v2820
      %2886 = vst.msk [vmem:[%s2863 + $0xb0] sm:$0xf] %vm2124, %v2821
      %2887 = vst.msk [vmem:[%s2863 + $0xb4] sm:$0xf] %vm2124, %v2822
      %2888 = vst.msk [vmem:[%s2863 + $0xc0] sm:$0xf] %vm2124, %v2823
      %2889 = vst.msk [vmem:[%s2863 + $0xc4] sm:$0xf] %vm2124, %v2824
      %2890 = vst.msk [vmem:[%s2863 + $0xd0] sm:$0xf] %vm2124, %v2825
      %2891 = vst.msk [vmem:[%s2863 + $0xd4] sm:$0xf] %vm2124, %v2826
      %2892 = vst.msk [vmem:[%s2863 + $0xe0] sm:$0xf] %vm2124, %v2827
      %2893 = vst.msk [vmem:[%s2863 + $0xe4] sm:$0xf] %vm2124, %v2828
      %2894 = vst.msk [vmem:[%s2863 + $0xf0] sm:$0xf] %vm2124, %v2829
      %2895 = vst.msk [vmem:[%s2863 + $0xf4] sm:$0xf] %vm2124, %v2830
      %s2896 = smul.u32 16, %s20
      %p2897 = scmp.lt.s32.totalorder %s19, 1
      %s2898 = scalar_select %p2897, %s19, 1
      %p2899 = scmp.lt.s32.totalorder %s2896, 15
      %s2900 = scalar_select %p2899, %s2896, 15
      %s2901 = smul.addr %s2900, 4
      %s2902 = smul.addr %s2898, 64
      %s2903 = sadd.s32 %s2901, %s2902
      %s2904 = smul.addr %s2903, 4
      %s2905 = scalar_lea.vmem %s4, %s2904
      // Predicated region
      $region37: #{upsample_block_forward.1} parent=35 // pred_check
        %p2906 = pneg %p149
      $region38: #{upsample_block_forward.1} parent=35 // pred_check_branch
        %2908 = sbr.rel (%p2906) target = $region40
      $region39: #{upsample_block_forward.1} parent=35 // pred_region
        %s2909 = smul.u32 16, %s20
      $region40: #{upsample_block_forward.1} parent=35 // pred_fallthru
        _
    $region36: #{upsample_block_forward.1} parent=5 // pred_fallthru
      _
    %p2910 = scmp.le.s32.totalorder 2, %s10
    // Predicated region
    $region41: #{upsample_block_forward.1} parent=5 // pred_check
      %p2911 = pneg %p2910
    $region42: #{upsample_block_forward.1} parent=5 // pred_check_branch
      %2913 = sbr.rel (%p2911) target = $region44
    $region43: #{upsample_block_forward.1} parent=5 // pred_region
      %s2914 = ssub.s32 %s10, 2
      // Predicated region
      $region45: #{upsample_block_forward.1} parent=43 // pred_check
        %p2915 = pneg %p155
      $region46: #{upsample_block_forward.1} parent=43 // pred_check_branch
        %2917 = sbr.rel (%p2915) target = $region48
      $region47: #{upsample_block_forward.1} parent=43 // pred_region
        %s2918 = smul.u32 16, %s22
        %p2919 = scmp.lt.s32.totalorder %s21, 1
        %s2920 = scalar_select %p2919, %s21, 1
        %p2921 = scmp.lt.s32.totalorder %s2918, 15
        %s2922 = scalar_select %p2921, %s2918, 15
        %s2923 = smul.addr %s2922, 4
        %s2924 = smul.addr %s2920, 64
        %s2925 = sadd.s32 %s2923, %s2924
        %s2926 = smul.addr %s2925, 4
        %s2927 = scalar_lea.vmem %s4, %s2926
      $region48: #{upsample_block_forward.1} parent=43 // pred_fallthru
        _
    $region44: #{upsample_block_forward.1} parent=5 // pred_fallthru
      _
  $region6: #{upsample_block_forward.1} parent=0 // loop_footer
    %s14 = sadd.s32 1, %s10
  $region7: #{upsample_block_forward.1} parent=0 // loop_footer_branch
    %9 = sbr.rel target = $region3
  $region8: #{upsample_block_forward.1} parent=0 // loop_exit
    _

</llo_original>
